<compile_context>
chip_gen: v7x
topology: tpu7x:2x2x1
jax: 0.10.0
libtpu: 0.0.40
codegen_flags: <defaults>
</compile_context>

<pallas_src>
import functools

import jax
import jax.numpy as jnp
from jax.experimental import pallas as pl
from jax.experimental.pallas import tpu as pltpu


# ------------------------------ Kernel body -------------------------------- #

def _lstm_gate_update(gates, c, D):
    """PyTorch LSTM gate math on a (N, 4D) pre-activation slab (order i,f,g,o)."""
    sig = jax.nn.sigmoid(gates)                 # one full-width EUP pass
    i = sig[:, 0 * D:1 * D]
    f = sig[:, 1 * D:2 * D]
    o = sig[:, 3 * D:4 * D]
    g = jnp.tanh(gates[:, 2 * D:3 * D])
    c_new = f * c + i * g
    h_new = o * jnp.tanh(c_new)
    return h_new, c_new


def fused_decode_kernel(U,                      # static context width
                        y_ref,                  # SMEM (T*N*U,) int32 ids (scalar prefetch)
                        t0_ref,                 # VMEM (vocab, 4D): emb@Wih0^T + b0 (fused)
                        whh0_ref,               # (D, 4D)
                        wih1_ref,               # (D, 4D)
                        whh1_ref,               # (D, 4D)
                        b1_ref,                 # (1, 4D)
                        pw1_ref, pb1_ref,       # (D, D), (1, D)
                        pw2_ref, pb2_ref,       # (D, 4D), (1, 4D)  lane-padded
                        state_in_ref,           # (N, 4D) initial packed state
                        out_ref,                # (1, N, 4D) per-step decoder_out (padded)
                        state_out_ref,          # (N, 4D) final packed state (aliased)
                        state_sc):              # VMEM scratch (N, 4D), carried over grid
    step = pl.program_id(0)
    vocab = t0_ref.shape[0]
    D = whh0_ref.shape[0]
    N = state_in_ref.shape[0]
    mm = whh0_ref.dtype                         # matmul operand dtype (f32 default)

    @pl.when(step == 0)
    def _():
        state_sc[...] = state_in_ref[...]

    h0 = state_sc[:, 0 * D:1 * D]
    c0 = state_sc[:, 1 * D:2 * D]
    h1 = state_sc[:, 2 * D:3 * D]
    c1 = state_sc[:, 3 * D:4 * D]

    # Statically unrolled over the short context window.
    for t in range(U):
        # In-kernel embedding gather from the FUSED (vocab, 4D=128) table: each
        # gathered row already equals x_t @ Wih0^T + b_ih0 + b_hh0 (lane-dense,
        # no [x, h] concat on the recurrent critical path).
        rows = []
        for n in range(N):
            tok = y_ref[(step * N + n) * U + t]
            tok = jnp.minimum(jnp.maximum(tok, 0), vocab - 1)   # guard OOB ids
            rows.append(t0_ref[pl.ds(tok, 1), :])
        g0 = jnp.concatenate(rows, axis=0) if N > 1 else rows[0]        # (N, 4D)
        g0 = g0 + jnp.dot(h0.astype(mm), whh0_ref[...],
                          preferred_element_type=jnp.float32)
        h0, c0 = _lstm_gate_update(g0, c0, D)

        # Layer 1: two accumulating matmuls instead of concat + fused matmul.
        g1 = (jnp.dot(h0.astype(mm), wih1_ref[...],
                      preferred_element_type=jnp.float32)
              + jnp.dot(h1.astype(mm), whh1_ref[...],
                        preferred_element_type=jnp.float32)
              + b1_ref[...])
        h1, c1 = _lstm_gate_update(g1, c1, D)

    # Carry packed state in one lane-dense (N, 4D = 128) slab.
    state_sc[...] = jnp.concatenate([h0, c0, h1, c1], axis=1)

    # Projection: Linear -> ReLU -> Dropout(eval: identity) -> Linear.
    # pw2/pb2 are zero-padded to 4D columns so the store is one unmasked
    # 128-lane vst (wrapper slices [:, :D]).
    # TODO(synk): training-mode Dropout(0.1) would need in-kernel PRNG masking.
    z = jnp.dot(h1.astype(mm), pw1_ref[...],
                preferred_element_type=jnp.float32) + pb1_ref[...]
    z = jnp.maximum(z, 0.0)
    dec = jnp.dot(z.astype(mm), pw2_ref[...],
                  preferred_element_type=jnp.float32) + pb2_ref[...]    # (N, 4D)
    out_ref[...] = dec[None]

    @pl.when(step == pl.num_programs(0) - 1)
    def _():
        state_out_ref[...] = state_sc[...]


# ------------------------- One-time parameter prep ------------------------- #

def prepare_params(params, matmul_dtype=jnp.float32):
    """One-time conversion of PyTorch-shaped params into kernel layout.

    Embedding is folded into layer-0's input projection; weights are
    transposed and biases fused so the per-step kernel emits no transpose/add
    HLOs.  `matmul_dtype=jnp.bfloat16` is a knob for v6e/v7x once shapes scale
    (breaks exact f32 parity); elementwise/gate math stays f32 regardless.
    """
    f32 = jnp.float32
    hi = jax.lax.Precision.HIGHEST
    D = params["embedding"].shape[1]
    emb = params["embedding"].astype(f32)

    # t0[v] = emb[v] @ Wih0^T + b_ih0 + b_hh0   -> (vocab, 4D), lane-dense rows
    t0 = (jnp.dot(emb, params["w_ih_l0"].T.astype(f32), precision=hi)
          + params["b_ih_l0"] + params["b_hh_l0"]).astype(f32)

    pw2 = jnp.zeros((D, 4 * D), matmul_dtype)
    pw2 = pw2.at[:, :D].set(params["proj_w2"].T.astype(matmul_dtype))
    pb2 = jnp.zeros((1, 4 * D), f32)
    pb2 = pb2.at[:, :D].set(params["proj_b2"].astype(f32)[None, :])

    return dict(
        t0=t0,
        whh0=params["w_hh_l0"].T.astype(matmul_dtype),   # (D, 4D)
        wih1=params["w_ih_l1"].T.astype(matmul_dtype),   # (D, 4D)
        whh1=params["w_hh_l1"].T.astype(matmul_dtype),   # (D, 4D)
        b1=(params["b_ih_l1"] + params["b_hh_l1"]).astype(f32)[None, :],
        pw1=params["proj_w1"].T.astype(matmul_dtype),    # (D, D)
        pb1=params["proj_b1"].astype(f32)[None, :],
        pw2=pw2, pb2=pb2,                                # lane-padded to 4D
    )


# ---------------------------- Pallas wrappers ------------------------------- #

def estonian_decoder_decode(prep, y_steps, packed_state):
    """Fused multi-step decode: ONE pallas_call, grid over decode steps.

    All weights use constant index_maps -> resident in VMEM for every step
    (no per-token launch / weight re-DMA).  y_steps: (T, N, U) int32 context
    windows; packed_state: (N, 4D) f32 [h0|c0|h1|c1].
    Returns (decoder_out (T, N, D), new packed_state (N, 4D)).
    """
    T, N, U = y_steps.shape
    D = prep["whh0"].shape[0]
    vocab = prep["t0"].shape[0]
    y_flat = y_steps.reshape(-1).astype(jnp.int32)        # 1-D SMEM, minimal padding

    def const(shape):
        return pl.BlockSpec(shape, lambda i, y, _s=shape: (0,) * len(_s))

    grid_spec = pltpu.PrefetchScalarGridSpec(
        num_scalar_prefetch=1,
        grid=(T,),
        in_specs=[
            const((vocab, 4 * D)),    # t0 fused embedding/Wih0/b0 table
            const((D, 4 * D)),        # whh0
            const((D, 4 * D)),        # wih1
            const((D, 4 * D)),        # whh1
            const((1, 4 * D)),        # b1
            const((D, D)),            # pw1
            const((1, D)),            # pb1
            const((D, 4 * D)),        # pw2 (lane-padded)
            const((1, 4 * D)),        # pb2 (lane-padded)
            const((N, 4 * D)),        # packed state (in)
        ],
        out_specs=(
            pl.BlockSpec((1, N, 4 * D), lambda i, y: (i, 0, 0)),   # per-step out
            pl.BlockSpec((N, 4 * D), lambda i, y: (0, 0)),         # final state
        ),
        scratch_shapes=[pltpu.VMEM((N, 4 * D), jnp.float32)],
    )
    out_all, state_new = pl.pallas_call(
        functools.partial(fused_decode_kernel, U),
        grid_spec=grid_spec,
        out_shape=(jax.ShapeDtypeStruct((T, N, 4 * D), jnp.float32),
                   jax.ShapeDtypeStruct((N, 4 * D), jnp.float32)),
        input_output_aliases={10: 1},     # packed state updated in place (P8)
        compiler_params=pltpu.CompilerParams(
            dimension_semantics=("arbitrary",)),      # state carries across steps
    )(y_flat, prep["t0"], prep["whh0"], prep["wih1"], prep["whh1"], prep["b1"],
      prep["pw1"], prep["pb1"], prep["pw2"], prep["pb2"], packed_state)
    return out_all[:, :, :D], state_new


def estonian_decoder_step(prep, y, packed_state):
    """Lean per-token path for a decode loop: packed (N,4D) state in/out."""
    dec, packed_new = estonian_decoder_decode(prep, y[None], packed_state)
    return dec[0], packed_new


def pack_state(state, N, D):
    if state is None:
        return jnp.zeros((N, 4 * D), jnp.float32)
    h, c = state
    return jnp.concatenate([h[0], c[0], h[1], c[1]], axis=1)


def unpack_state(packed, D):
    h = jnp.stack([packed[:, 0 * D:1 * D], packed[:, 2 * D:3 * D]])
    c = jnp.stack([packed[:, 1 * D:2 * D], packed[:, 3 * D:4 * D]])
    return h, c


@functools.partial(jax.jit, static_argnames=("need_pad", "blank_id", "context_size"))
def estonian_decoder_forward(prep, y, need_pad=False, state=None,
                             blank_id=0, context_size=2):
    """API-compatible forward mirroring EstonianDecoder.forward.

    Returns (decoder_out (N, D), (h, c)) with h, c of shape (2, N, D).  The
    (2,N,D) <-> packed conversion happens only at this API boundary; a decode
    loop should carry the packed state and call estonian_decoder_step /
    estonian_decoder_decode directly.
    """
    N, U = y.shape
    if need_pad and U < context_size:
        pad = jnp.full((N, context_size - U), blank_id, dtype=y.dtype)
        y = jnp.concatenate([pad, y], axis=1)
    D = prep["whh0"].shape[0]
    packed = pack_state(state, N, D)
    dec, packed_new = estonian_decoder_step(prep, y, packed)
    return dec, unpack_state(packed_new, D)


# --------------------------- Deterministic params --------------------------- #

def init_params(key, vocab_size, decoder_dim):
    D = decoder_dim
    ks = jax.random.split(key, 13)
    scale = 1.0 / jnp.sqrt(jnp.float32(D))

    def u(k, shape):
        return jax.random.uniform(k, shape, jnp.float32, -scale, scale)

    return dict(
        embedding=u(ks[0], (vocab_size, D)),
        # PyTorch nn.LSTM parameter shapes: weight_* (4D, D), bias_* (4D,)
        w_ih_l0=u(ks[1], (4 * D, D)), w_hh_l0=u(ks[2], (4 * D, D)),
        b_ih_l0=u(ks[3], (4 * D,)),   b_hh_l0=u(ks[4], (4 * D,)),
        w_ih_l1=u(ks[5], (4 * D, D)), w_hh_l1=u(ks[6], (4 * D, D)),
        b_ih_l1=u(ks[7], (4 * D,)),   b_hh_l1=u(ks[8], (4 * D,)),
        # projection: Linear(D,D) -> ReLU -> Dropout -> Linear(D,D)
        proj_w1=u(ks[9], (D, D)),  proj_b1=u(ks[10], (D,)),
        proj_w2=u(ks[11], (D, D)), proj_b2=u(ks[12], (D,)),
    )


# ----------------------------- Pure-JAX reference --------------------------- #

def reference_forward(params, y, need_pad=False, state=None,
                      blank_id=0, context_size=2):
    hi = jax.lax.Precision.HIGHEST
    N, U = y.shape
    if need_pad and U < context_size:
        pad = jnp.full((N, context_size - U), blank_id, dtype=y.dtype)
        y = jnp.concatenate([pad, y], axis=1)
        U = context_size
    D = params["embedding"].shape[1]
    emb = params["embedding"][y]                          # (N, U, D)
    if state is None:
        h0 = jnp.zeros((2, N, D), jnp.float32)
        c0 = jnp.zeros((2, N, D), jnp.float32)
    else:
        h0, c0 = state

    def cell(x, h, c, wih, whh, bih, bhh):
        g = (jnp.dot(x, wih.T, precision=hi) + bih
             + jnp.dot(h, whh.T, precision=hi) + bhh)
        i, f, gg, o = jnp.split(g, 4, axis=-1)
        c2 = jax.nn.sigmoid(f) * c + jax.nn.sigmoid(i) * jnp.tanh(gg)
        return jax.nn.sigmoid(o) * jnp.tanh(c2), c2

    h, c = h0[0], c0[0]
    outs0 = []
    for t in range(U):
        h, c = cell(emb[:, t], h, c, params["w_ih_l0"], params["w_hh_l0"],
                    params["b_ih_l0"], params["b_hh_l0"])
        outs0.append(h)
    hA, cA = h, c

    h, c = h0[1], c0[1]
    for t in range(U):
        h, c = cell(outs0[t], h, c, params["w_ih_l1"], params["w_hh_l1"],
                    params["b_ih_l1"], params["b_hh_l1"])
    hB, cB = h, c

    z = jnp.maximum(jnp.dot(h, params["proj_w1"].T, precision=hi)
                    + params["proj_b1"], 0.0)
    dec = jnp.dot(z, params["proj_w2"].T, precision=hi) + params["proj_b2"]
    return dec, (jnp.stack([hA, hB]), jnp.stack([cA, cB]))


# ---------------------------------- Main ------------------------------------ #

if __name__ == "__main__":
    key = jax.random.PRNGKey(0)
    k_params, k_tok1, k_tok2, k_tok3 = jax.random.split(key, 4)

    vocab_size, decoder_dim = 50, 32
    N, context_size = 2, 2
    n_steps = 4

    params = init_params(k_params, vocab_size, decoder_dim)
    prep = prepare_params(params)         # one-time weight prep (hoisted)

    # ---- API-compatible single forward calls (fresh state, then carried). ----
    y1 = jax.random.randint(k_tok1, (N, context_size), 1, vocab_size, dtype=jnp.int32)
    y2 = jax.random.randint(k_tok2, (N, context_size), 1, vocab_size, dtype=jnp.int32)

    dec1, (h1, c1) = estonian_decoder_forward(prep, y1, need_pad=True, state=None,
                                              context_size=context_size)
    dec2, (h2, c2) = estonian_decoder_forward(prep, y2, need_pad=True, state=(h1, c1),
                                              context_size=context_size)

    # ---- Fused multi-step decode: one pallas_call, grid over decode steps. ----
    y_steps = jax.random.randint(k_tok3, (n_steps, N, context_size), 1, vocab_size,
                                 dtype=jnp.int32)
    packed0 = jnp.zeros((N, 4 * decoder_dim), jnp.float32)
    dec_all, packed_fin = jax.jit(estonian_decoder_decode)(prep, y_steps, packed0)
    jax.block_until_ready((dec1, h1, c1, dec2, h2, c2, dec_all, packed_fin))

    # ---- Pure-JAX reference. ----
    r_dec1, (r_h1, r_c1) = reference_forward(params, y1, need_pad=True, state=None,
                                             context_size=context_size)
    r_dec2, (r_h2, r_c2) = reference_forward(params, y2, need_pad=True,
                                             state=(r_h1, r_c1),
                                             context_size=context_size)
    r_state = None
    r_decs = []
    for s in range(n_steps):
        d, r_state = reference_forward(params, y_steps[s], need_pad=True,
                                       state=r_state, context_size=context_size)
        r_decs.append(d)
    r_dec_all = jnp.stack(r_decs)
    h_fin, c_fin = unpack_state(packed_fin, decoder_dim)

    assert dec1.shape == (N, decoder_dim)
    assert h1.shape == (2, N, decoder_dim) and c1.shape == (2, N, decoder_dim)
    assert dec_all.shape == (n_steps, N, decoder_dim)
    checks = [(dec1, r_dec1), (h1, r_h1), (c1, r_c1),
              (dec2, r_dec2), (h2, r_h2), (c2, r_c2),
              (dec_all, r_dec_all), (h_fin, r_state[0]), (c_fin, r_state[1])]
    for got, want in checks:
        assert jnp.allclose(got, want, atol=1e-5, rtol=1e-5), \
            float(jnp.max(jnp.abs(got - want)))

    print("KERNEL_OK")
</pallas_src>

<mosaic_0001>
module attributes {stable_mosaic.version = 11 : i64} {
  func.func @fused_decode_kernel(%arg0: i32, %arg1: memref<4xi32, #tpu.memory_space<smem>>, %arg2: memref<50x128xf32, #tpu.memory_space<vmem>>, %arg3: memref<32x128xf32, #tpu.memory_space<vmem>>, %arg4: memref<32x128xf32, #tpu.memory_space<vmem>>, %arg5: memref<32x128xf32, #tpu.memory_space<vmem>>, %arg6: memref<1x128xf32, #tpu.memory_space<vmem>>, %arg7: memref<32x32xf32, #tpu.memory_space<vmem>>, %arg8: memref<1x32xf32, #tpu.memory_space<vmem>>, %arg9: memref<32x128xf32, #tpu.memory_space<vmem>>, %arg10: memref<1x128xf32, #tpu.memory_space<vmem>>, %arg11: memref<2x128xf32, #tpu.memory_space<vmem>>, %arg12: memref<1x2x128xf32, #tpu.memory_space<vmem>>, %arg13: memref<2x128xf32, #tpu.memory_space<vmem>>, %arg14: memref<2x128xf32, #tpu.memory_space<vmem>>) attributes {dimension_semantics = [#tpu.dimension_semantics<arbitrary>], iteration_bounds = array<i64: 1>, scalar_prefetch = 1 : i64, scratch_operands = 1 : i64, tpu.core_type = #tpu.core_type<tc>, window_params = [{pipeline_mode = #tpu.pipeline_mode<synchronous>, transform_indices = @transform_0, window_bounds = array<i64: 50, 128>}, {pipeline_mode = #tpu.pipeline_mode<synchronous>, transform_indices = @transform_1, window_bounds = array<i64: 32, 128>}, {pipeline_mode = #tpu.pipeline_mode<synchronous>, transform_indices = @transform_2, window_bounds = array<i64: 32, 128>}, {pipeline_mode = #tpu.pipeline_mode<synchronous>, transform_indices = @transform_3, window_bounds = array<i64: 32, 128>}, {pipeline_mode = #tpu.pipeline_mode<synchronous>, transform_indices = @transform_4, window_bounds = array<i64: 1, 128>}, {pipeline_mode = #tpu.pipeline_mode<synchronous>, transform_indices = @transform_5, window_bounds = array<i64: 32, 32>}, {pipeline_mode = #tpu.pipeline_mode<synchronous>, transform_indices = @transform_6, window_bounds = array<i64: 1, 32>}, {pipeline_mode = #tpu.pipeline_mode<synchronous>, transform_indices = @transform_7, window_bounds = array<i64: 32, 128>}, {pipeline_mode = #tpu.pipeline_mode<synchronous>, transform_indices = @transform_8, window_bounds = array<i64: 1, 128>}, {pipeline_mode = #tpu.pipeline_mode<synchronous>, transform_indices = @transform_9, window_bounds = array<i64: 2, 128>}, {transform_indices = @transform_10, window_bounds = array<i64: 1, 2, 128>}, {pipeline_mode = #tpu.pipeline_mode<synchronous>, transform_indices = @transform_11, window_bounds = array<i64: 2, 128>}]} {
    %c0_i32 = arith.constant 0 : i32
    %0 = arith.cmpi eq, %arg0, %c0_i32 : i32
    %1 = arith.extui %0 : i1 to i32
    %c0_i32_0 = arith.constant 0 : i32
    %2 = arith.cmpi ne, %1, %c0_i32_0 : i32
    scf.if %2 {
      %c0_73 = arith.constant 0 : index
      %c0_74 = arith.constant 0 : index
      %150 = vector.load %arg11[%c0_73, %c0_74] : memref<2x128xf32, #tpu.memory_space<vmem>>, vector<2x128xf32>
      %c0_75 = arith.constant 0 : index
      %c0_76 = arith.constant 0 : index
      %151 = vector.load %arg14[%c0_75, %c0_76] : memref<2x128xf32, #tpu.memory_space<vmem>>, vector<2x128xf32>
      tpu.vector_store %arg14[%c0_75, %c0_76], %150 {strides = array<i32>} : memref<2x128xf32, #tpu.memory_space<vmem>>, vector<2x128xf32>,
    } else {
    }
    %c0 = arith.constant 0 : index
    %c0_1 = arith.constant 0 : index
    %3 = vector.load %arg14[%c0, %c0_1] : memref<2x128xf32, #tpu.memory_space<vmem>>, vector<2x32xf32>
    %c0_2 = arith.constant 0 : index
    %c32 = arith.constant 32 : index
    %4 = vector.load %arg14[%c0_2, %c32] : memref<2x128xf32, #tpu.memory_space<vmem>>, vector<2x32xf32>
    %c0_3 = arith.constant 0 : index
    %c64 = arith.constant 64 : index
    %5 = vector.load %arg14[%c0_3, %c64] : memref<2x128xf32, #tpu.memory_space<vmem>>, vector<2x32xf32>
    %c0_4 = arith.constant 0 : index
    %c96 = arith.constant 96 : index
    %6 = vector.load %arg14[%c0_4, %c96] : memref<2x128xf32, #tpu.memory_space<vmem>>, vector<2x32xf32>
    %c2_i32 = arith.constant 2 : i32
    %7 = arith.muli %arg0, %c2_i32 : i32
    %c0_i32_5 = arith.constant 0 : i32
    %8 = arith.addi %7, %c0_i32_5 : i32
    %c2_i32_6 = arith.constant 2 : i32
    %9 = arith.muli %8, %c2_i32_6 : i32
    %c0_i32_7 = arith.constant 0 : i32
    %10 = arith.addi %9, %c0_i32_7 : i32
    %11 = arith.index_cast %10 : i32 to index
    %12 = memref.load %arg1[%11] : memref<4xi32, #tpu.memory_space<smem>>
    %c0_i32_8 = arith.constant 0 : i32
    %13 = arith.maxsi %12, %c0_i32_8 : i32
    %c49_i32 = arith.constant 49 : i32
    %14 = arith.minsi %13, %c49_i32 : i32
    %15 = arith.index_cast %14 : i32 to index
    %c0_9 = arith.constant 0 : index
    %16 = vector.load %arg2[%15, %c0_9] : memref<50x128xf32, #tpu.memory_space<vmem>>, vector<1x128xf32>
    %c2_i32_10 = arith.constant 2 : i32
    %17 = arith.muli %arg0, %c2_i32_10 : i32
    %c1_i32 = arith.constant 1 : i32
    %18 = arith.addi %17, %c1_i32 : i32
    %c2_i32_11 = arith.constant 2 : i32
    %19 = arith.muli %18, %c2_i32_11 : i32
    %c0_i32_12 = arith.constant 0 : i32
    %20 = arith.addi %19, %c0_i32_12 : i32
    %21 = arith.index_cast %20 : i32 to index
    %22 = memref.load %arg1[%21] : memref<4xi32, #tpu.memory_space<smem>>
    %c0_i32_13 = arith.constant 0 : i32
    %23 = arith.maxsi %22, %c0_i32_13 : i32
    %c49_i32_14 = arith.constant 49 : i32
    %24 = arith.minsi %23, %c49_i32_14 : i32
    %25 = arith.index_cast %24 : i32 to index
    %c0_15 = arith.constant 0 : index
    %26 = vector.load %arg2[%25, %c0_15] : memref<50x128xf32, #tpu.memory_space<vmem>>, vector<1x128xf32>
    %27 = tpu.concatenate %16, %26 in 0 : vector<1x128xf32>, vector<1x128xf32> -> vector<2x128xf32>
    %c0_16 = arith.constant 0 : index
    %c0_17 = arith.constant 0 : index
    %28 = vector.load %arg3[%c0_16, %c0_17] : memref<32x128xf32, #tpu.memory_space<vmem>>, vector<32x128xf32>
    %cst = arith.constant dense<0.000000e+00> : vector<2x128xf32>
    %29 = tpu.matmul %3, %28, %cst {dimension_numbers = #tpu.dot_dimension_numbers<[1], [0], [0], [1], [0, 0, 1, 1], [], []>} : vector<2x32xf32>, vector<32x128xf32>, vector<2x128xf32> -> vector<2x128xf32>
    %30 = arith.addf %27, %29 : vector<2x128xf32>
    %31 = arith.negf %30 : vector<2x128xf32>
    %32 = math.exp %31 : vector<2x128xf32>
    %cst_18 = arith.constant 1.000000e+00 : f32
    %33 = vector.broadcast %cst_18 : f32 to vector<2x128xf32>
    %34 = arith.addf %33, %32 : vector<2x128xf32>
    %35 = arith.divf %33, %34 : vector<2x128xf32>
    %36 = vector.extract_strided_slice %35 {offsets = [0, 0], sizes = [2, 32], strides = [1, 1]} : vector<2x128xf32> to vector<2x32xf32>
    %37 = vector.extract_strided_slice %35 {offsets = [0, 32], sizes = [2, 32], strides = [1, 1]} : vector<2x128xf32> to vector<2x32xf32>
    %38 = vector.extract_strided_slice %35 {offsets = [0, 96], sizes = [2, 32], strides = [1, 1]} : vector<2x128xf32> to vector<2x32xf32>
    %39 = vector.extract_strided_slice %30 {offsets = [0, 64], sizes = [2, 32], strides = [1, 1]} : vector<2x128xf32> to vector<2x32xf32>
    %40 = math.tanh %39 : vector<2x32xf32>
    %41 = arith.mulf %37, %4 : vector<2x32xf32>
    %42 = arith.mulf %36, %40 : vector<2x32xf32>
    %43 = arith.addf %41, %42 : vector<2x32xf32>
    %44 = math.tanh %43 : vector<2x32xf32>
    %45 = arith.mulf %38, %44 : vector<2x32xf32>
    %c0_19 = arith.constant 0 : index
    %c0_20 = arith.constant 0 : index
    %46 = vector.load %arg4[%c0_19, %c0_20] : memref<32x128xf32, #tpu.memory_space<vmem>>, vector<32x128xf32>
    %cst_21 = arith.constant dense<0.000000e+00> : vector<2x128xf32>
    %47 = tpu.matmul %45, %46, %cst_21 {dimension_numbers = #tpu.dot_dimension_numbers<[1], [0], [0], [1], [0, 0, 1, 1], [], []>} : vector<2x32xf32>, vector<32x128xf32>, vector<2x128xf32> -> vector<2x128xf32>
    %c0_22 = arith.constant 0 : index
    %c0_23 = arith.constant 0 : index
    %48 = vector.load %arg5[%c0_22, %c0_23] : memref<32x128xf32, #tpu.memory_space<vmem>>, vector<32x128xf32>
    %cst_24 = arith.constant dense<0.000000e+00> : vector<2x128xf32>
    %49 = tpu.matmul %5, %48, %cst_24 {dimension_numbers = #tpu.dot_dimension_numbers<[1], [0], [0], [1], [0, 0, 1, 1], [], []>} : vector<2x32xf32>, vector<32x128xf32>, vector<2x128xf32> -> vector<2x128xf32>
    %50 = arith.addf %47, %49 : vector<2x128xf32>
    %c0_25 = arith.constant 0 : index
    %c0_26 = arith.constant 0 : index
    %51 = vector.load %arg6[%c0_25, %c0_26] : memref<1x128xf32, #tpu.memory_space<vmem>>, vector<1x128xf32>
    %52 = vector.broadcast %51 : vector<1x128xf32> to vector<2x128xf32>
    %53 = arith.addf %50, %52 : vector<2x128xf32>
    %54 = arith.negf %53 : vector<2x128xf32>
    %55 = math.exp %54 : vector<2x128xf32>
    %cst_27 = arith.constant 1.000000e+00 : f32
    %56 = vector.broadcast %cst_27 : f32 to vector<2x128xf32>
    %57 = arith.addf %56, %55 : vector<2x128xf32>
    %58 = arith.divf %56, %57 : vector<2x128xf32>
    %59 = vector.extract_strided_slice %58 {offsets = [0, 0], sizes = [2, 32], strides = [1, 1]} : vector<2x128xf32> to vector<2x32xf32>
    %60 = vector.extract_strided_slice %58 {offsets = [0, 32], sizes = [2, 32], strides = [1, 1]} : vector<2x128xf32> to vector<2x32xf32>
    %61 = vector.extract_strided_slice %58 {offsets = [0, 96], sizes = [2, 32], strides = [1, 1]} : vector<2x128xf32> to vector<2x32xf32>
    %62 = vector.extract_strided_slice %53 {offsets = [0, 64], sizes = [2, 32], strides = [1, 1]} : vector<2x128xf32> to vector<2x32xf32>
    %63 = math.tanh %62 : vector<2x32xf32>
    %64 = arith.mulf %60, %6 : vector<2x32xf32>
    %65 = arith.mulf %59, %63 : vector<2x32xf32>
    %66 = arith.addf %64, %65 : vector<2x32xf32>
    %67 = math.tanh %66 : vector<2x32xf32>
    %68 = arith.mulf %61, %67 : vector<2x32xf32>
    %c2_i32_28 = arith.constant 2 : i32
    %69 = arith.muli %arg0, %c2_i32_28 : i32
    %c0_i32_29 = arith.constant 0 : i32
    %70 = arith.addi %69, %c0_i32_29 : i32
    %c2_i32_30 = arith.constant 2 : i32
    %71 = arith.muli %70, %c2_i32_30 : i32
    %c1_i32_31 = arith.constant 1 : i32
    %72 = arith.addi %71, %c1_i32_31 : i32
    %73 = arith.index_cast %72 : i32 to index
    %74 = memref.load %arg1[%73] : memref<4xi32, #tpu.memory_space<smem>>
    %c0_i32_32 = arith.constant 0 : i32
    %75 = arith.maxsi %74, %c0_i32_32 : i32
    %c49_i32_33 = arith.constant 49 : i32
    %76 = arith.minsi %75, %c49_i32_33 : i32
    %77 = arith.index_cast %76 : i32 to index
    %c0_34 = arith.constant 0 : index
    %78 = vector.load %arg2[%77, %c0_34] : memref<50x128xf32, #tpu.memory_space<vmem>>, vector<1x128xf32>
    %c2_i32_35 = arith.constant 2 : i32
    %79 = arith.muli %arg0, %c2_i32_35 : i32
    %c1_i32_36 = arith.constant 1 : i32
    %80 = arith.addi %79, %c1_i32_36 : i32
    %c2_i32_37 = arith.constant 2 : i32
    %81 = arith.muli %80, %c2_i32_37 : i32
    %c1_i32_38 = arith.constant 1 : i32
    %82 = arith.addi %81, %c1_i32_38 : i32
    %83 = arith.index_cast %82 : i32 to index
    %84 = memref.load %arg1[%83] : memref<4xi32, #tpu.memory_space<smem>>
    %c0_i32_39 = arith.constant 0 : i32
    %85 = arith.maxsi %84, %c0_i32_39 : i32
    %c49_i32_40 = arith.constant 49 : i32
    %86 = arith.minsi %85, %c49_i32_40 : i32
    %87 = arith.index_cast %86 : i32 to index
    %c0_41 = arith.constant 0 : index
    %88 = vector.load %arg2[%87, %c0_41] : memref<50x128xf32, #tpu.memory_space<vmem>>, vector<1x128xf32>
    %89 = tpu.concatenate %78, %88 in 0 : vector<1x128xf32>, vector<1x128xf32> -> vector<2x128xf32>
    %c0_42 = arith.constant 0 : index
    %c0_43 = arith.constant 0 : index
    %90 = vector.load %arg3[%c0_42, %c0_43] : memref<32x128xf32, #tpu.memory_space<vmem>>, vector<32x128xf32>
    %cst_44 = arith.constant dense<0.000000e+00> : vector<2x128xf32>
    %91 = tpu.matmul %45, %90, %cst_44 {dimension_numbers = #tpu.dot_dimension_numbers<[1], [0], [0], [1], [0, 0, 1, 1], [], []>} : vector<2x32xf32>, vector<32x128xf32>, vector<2x128xf32> -> vector<2x128xf32>
    %92 = arith.addf %89, %91 : vector<2x128xf32>
    %93 = arith.negf %92 : vector<2x128xf32>
    %94 = math.exp %93 : vector<2x128xf32>
    %cst_45 = arith.constant 1.000000e+00 : f32
    %95 = vector.broadcast %cst_45 : f32 to vector<2x128xf32>
    %96 = arith.addf %95, %94 : vector<2x128xf32>
    %97 = arith.divf %95, %96 : vector<2x128xf32>
    %98 = vector.extract_strided_slice %97 {offsets = [0, 0], sizes = [2, 32], strides = [1, 1]} : vector<2x128xf32> to vector<2x32xf32>
    %99 = vector.extract_strided_slice %97 {offsets = [0, 32], sizes = [2, 32], strides = [1, 1]} : vector<2x128xf32> to vector<2x32xf32>
    %100 = vector.extract_strided_slice %97 {offsets = [0, 96], sizes = [2, 32], strides = [1, 1]} : vector<2x128xf32> to vector<2x32xf32>
    %101 = vector.extract_strided_slice %92 {offsets = [0, 64], sizes = [2, 32], strides = [1, 1]} : vector<2x128xf32> to vector<2x32xf32>
    %102 = math.tanh %101 : vector<2x32xf32>
    %103 = arith.mulf %99, %43 : vector<2x32xf32>
    %104 = arith.mulf %98, %102 : vector<2x32xf32>
    %105 = arith.addf %103, %104 : vector<2x32xf32>
    %106 = math.tanh %105 : vector<2x32xf32>
    %107 = arith.mulf %100, %106 : vector<2x32xf32>
    %c0_46 = arith.constant 0 : index
    %c0_47 = arith.constant 0 : index
    %108 = vector.load %arg4[%c0_46, %c0_47] : memref<32x128xf32, #tpu.memory_space<vmem>>, vector<32x128xf32>
    %cst_48 = arith.constant dense<0.000000e+00> : vector<2x128xf32>
    %109 = tpu.matmul %107, %108, %cst_48 {dimension_numbers = #tpu.dot_dimension_numbers<[1], [0], [0], [1], [0, 0, 1, 1], [], []>} : vector<2x32xf32>, vector<32x128xf32>, vector<2x128xf32> -> vector<2x128xf32>
    %c0_49 = arith.constant 0 : index
    %c0_50 = arith.constant 0 : index
    %110 = vector.load %arg5[%c0_49, %c0_50] : memref<32x128xf32, #tpu.memory_space<vmem>>, vector<32x128xf32>
    %cst_51 = arith.constant dense<0.000000e+00> : vector<2x128xf32>
    %111 = tpu.matmul %68, %110, %cst_51 {dimension_numbers = #tpu.dot_dimension_numbers<[1], [0], [0], [1], [0, 0, 1, 1], [], []>} : vector<2x32xf32>, vector<32x128xf32>, vector<2x128xf32> -> vector<2x128xf32>
    %112 = arith.addf %109, %111 : vector<2x128xf32>
    %c0_52 = arith.constant 0 : index
    %c0_53 = arith.constant 0 : index
    %113 = vector.load %arg6[%c0_52, %c0_53] : memref<1x128xf32, #tpu.memory_space<vmem>>, vector<1x128xf32>
    %114 = vector.broadcast %113 : vector<1x128xf32> to vector<2x128xf32>
    %115 = arith.addf %112, %114 : vector<2x128xf32>
    %116 = arith.negf %115 : vector<2x128xf32>
    %117 = math.exp %116 : vector<2x128xf32>
    %cst_54 = arith.constant 1.000000e+00 : f32
    %118 = vector.broadcast %cst_54 : f32 to vector<2x128xf32>
    %119 = arith.addf %118, %117 : vector<2x128xf32>
    %120 = arith.divf %118, %119 : vector<2x128xf32>
    %121 = vector.extract_strided_slice %120 {offsets = [0, 0], sizes = [2, 32], strides = [1, 1]} : vector<2x128xf32> to vector<2x32xf32>
    %122 = vector.extract_strided_slice %120 {offsets = [0, 32], sizes = [2, 32], strides = [1, 1]} : vector<2x128xf32> to vector<2x32xf32>
    %123 = vector.extract_strided_slice %120 {offsets = [0, 96], sizes = [2, 32], strides = [1, 1]} : vector<2x128xf32> to vector<2x32xf32>
    %124 = vector.extract_strided_slice %115 {offsets = [0, 64], sizes = [2, 32], strides = [1, 1]} : vector<2x128xf32> to vector<2x32xf32>
    %125 = math.tanh %124 : vector<2x32xf32>
    %126 = arith.mulf %122, %66 : vector<2x32xf32>
    %127 = arith.mulf %121, %125 : vector<2x32xf32>
    %128 = arith.addf %126, %127 : vector<2x32xf32>
    %129 = math.tanh %128 : vector<2x32xf32>
    %130 = arith.mulf %123, %129 : vector<2x32xf32>
    %131 = tpu.concatenate %107, %105, %130, %128 in 1 : vector<2x32xf32>, vector<2x32xf32>, vector<2x32xf32>, vector<2x32xf32> -> vector<2x128xf32>
    %c0_55 = arith.constant 0 : index
    %c0_56 = arith.constant 0 : index
    %132 = vector.load %arg14[%c0_55, %c0_56] : memref<2x128xf32, #tpu.memory_space<vmem>>, vector<2x128xf32>
    tpu.vector_store %arg14[%c0_55, %c0_56], %131 {strides = array<i32>} : memref<2x128xf32, #tpu.memory_space<vmem>>, vector<2x128xf32>,
    %c0_57 = arith.constant 0 : index
    %c0_58 = arith.constant 0 : index
    %133 = vector.load %arg7[%c0_57, %c0_58] : memref<32x32xf32, #tpu.memory_space<vmem>>, vector<32x32xf32>
    %cst_59 = arith.constant dense<0.000000e+00> : vector<2x32xf32>
    %134 = tpu.matmul %130, %133, %cst_59 {dimension_numbers = #tpu.dot_dimension_numbers<[1], [0], [0], [1], [0, 0, 1, 1], [], []>} : vector<2x32xf32>, vector<32x32xf32>, vector<2x32xf32> -> vector<2x32xf32>
    %c0_60 = arith.constant 0 : index
    %c0_61 = arith.constant 0 : index
    %135 = vector.load %arg8[%c0_60, %c0_61] : memref<1x32xf32, #tpu.memory_space<vmem>>, vector<1x32xf32>
    %136 = vector.broadcast %135 : vector<1x32xf32> to vector<2x32xf32>
    %137 = arith.addf %134, %136 : vector<2x32xf32>
    %cst_62 = arith.constant 0.000000e+00 : f32
    %138 = vector.broadcast %cst_62 : f32 to vector<2x32xf32>
    %139 = arith.maximumf %137, %138 : vector<2x32xf32>
    %c0_63 = arith.constant 0 : index
    %c0_64 = arith.constant 0 : index
    %140 = vector.load %arg9[%c0_63, %c0_64] : memref<32x128xf32, #tpu.memory_space<vmem>>, vector<32x128xf32>
    %cst_65 = arith.constant dense<0.000000e+00> : vector<2x128xf32>
    %141 = tpu.matmul %139, %140, %cst_65 {dimension_numbers = #tpu.dot_dimension_numbers<[1], [0], [0], [1], [0, 0, 1, 1], [], []>} : vector<2x32xf32>, vector<32x128xf32>, vector<2x128xf32> -> vector<2x128xf32>
    %c0_66 = arith.constant 0 : index
    %c0_67 = arith.constant 0 : index
    %142 = vector.load %arg10[%c0_66, %c0_67] : memref<1x128xf32, #tpu.memory_space<vmem>>, vector<1x128xf32>
    %143 = vector.broadcast %142 : vector<1x128xf32> to vector<2x128xf32>
    %144 = arith.addf %141, %143 : vector<2x128xf32>
    %145 = vector.shape_cast %144 : vector<2x128xf32> to vector<1x2x128xf32>
    %c0_68 = arith.constant 0 : index
    %c0_69 = arith.constant 0 : index
    %c0_70 = arith.constant 0 : index
    %146 = vector.load %arg12[%c0_68, %c0_69, %c0_70] : memref<1x2x128xf32, #tpu.memory_space<vmem>>, vector<1x2x128xf32>
    tpu.vector_store %arg12[%c0_68, %c0_69, %c0_70], %145 {strides = array<i32>} : memref<1x2x128xf32, #tpu.memory_space<vmem>>, vector<1x2x128xf32>,
    %c0_i32_71 = arith.constant 0 : i32
    %147 = arith.cmpi eq, %arg0, %c0_i32_71 : i32
    %148 = arith.extui %147 : i1 to i32
    %c0_i32_72 = arith.constant 0 : i32
    %149 = arith.cmpi ne, %148, %c0_i32_72 : i32
    scf.if %149 {
      %c0_73 = arith.constant 0 : index
      %c0_74 = arith.constant 0 : index
      %150 = vector.load %arg14[%c0_73, %c0_74] : memref<2x128xf32, #tpu.memory_space<vmem>>, vector<2x128xf32>
      %c0_75 = arith.constant 0 : index
      %c0_76 = arith.constant 0 : index
      %151 = vector.load %arg13[%c0_75, %c0_76] : memref<2x128xf32, #tpu.memory_space<vmem>>, vector<2x128xf32>
      tpu.vector_store %arg13[%c0_75, %c0_76], %150 {strides = array<i32>} : memref<2x128xf32, #tpu.memory_space<vmem>>, vector<2x128xf32>,
    } else {
    }
    return
  }
  func.func @transform_0(%arg0: i32, %arg1: memref<4xi32, #tpu.memory_space<smem>>) -> (i32, i32) {
    %c0_i32 = arith.constant 0 : i32
    %c0_i32_0 = arith.constant 0 : i32
    %c0_i32_1 = arith.constant 0 : i32
    return %c0_i32, %c0_i32_0 : i32, i32
  }
  func.func @transform_1(%arg0: i32, %arg1: memref<4xi32, #tpu.memory_space<smem>>) -> (i32, i32) {
    %c0_i32 = arith.constant 0 : i32
    %c0_i32_0 = arith.constant 0 : i32
    %c0_i32_1 = arith.constant 0 : i32
    return %c0_i32, %c0_i32_0 : i32, i32
  }
  func.func @transform_2(%arg0: i32, %arg1: memref<4xi32, #tpu.memory_space<smem>>) -> (i32, i32) {
    %c0_i32 = arith.constant 0 : i32
    %c0_i32_0 = arith.constant 0 : i32
    %c0_i32_1 = arith.constant 0 : i32
    return %c0_i32, %c0_i32_0 : i32, i32
  }
  func.func @transform_3(%arg0: i32, %arg1: memref<4xi32, #tpu.memory_space<smem>>) -> (i32, i32) {
    %c0_i32 = arith.constant 0 : i32
    %c0_i32_0 = arith.constant 0 : i32
    %c0_i32_1 = arith.constant 0 : i32
    return %c0_i32, %c0_i32_0 : i32, i32
  }
  func.func @transform_4(%arg0: i32, %arg1: memref<4xi32, #tpu.memory_space<smem>>) -> (i32, i32) {
    %c0_i32 = arith.constant 0 : i32
    %c0_i32_0 = arith.constant 0 : i32
    %c0_i32_1 = arith.constant 0 : i32
    return %c0_i32, %c0_i32_0 : i32, i32
  }
  func.func @transform_5(%arg0: i32, %arg1: memref<4xi32, #tpu.memory_space<smem>>) -> (i32, i32) {
    %c0_i32 = arith.constant 0 : i32
    %c0_i32_0 = arith.constant 0 : i32
    %c0_i32_1 = arith.constant 0 : i32
    return %c0_i32, %c0_i32_0 : i32, i32
  }
  func.func @transform_6(%arg0: i32, %arg1: memref<4xi32, #tpu.memory_space<smem>>) -> (i32, i32) {
    %c0_i32 = arith.constant 0 : i32
    %c0_i32_0 = arith.constant 0 : i32
    %c0_i32_1 = arith.constant 0 : i32
    return %c0_i32, %c0_i32_0 : i32, i32
  }
  func.func @transform_7(%arg0: i32, %arg1: memref<4xi32, #tpu.memory_space<smem>>) -> (i32, i32) {
    %c0_i32 = arith.constant 0 : i32
    %c0_i32_0 = arith.constant 0 : i32
    %c0_i32_1 = arith.constant 0 : i32
    return %c0_i32, %c0_i32_0 : i32, i32
  }
  func.func @transform_8(%arg0: i32, %arg1: memref<4xi32, #tpu.memory_space<smem>>) -> (i32, i32) {
    %c0_i32 = arith.constant 0 : i32
    %c0_i32_0 = arith.constant 0 : i32
    %c0_i32_1 = arith.constant 0 : i32
    return %c0_i32, %c0_i32_0 : i32, i32
  }
  func.func @transform_9(%arg0: i32, %arg1: memref<4xi32, #tpu.memory_space<smem>>) -> (i32, i32) {
    %c0_i32 = arith.constant 0 : i32
    %c0_i32_0 = arith.constant 0 : i32
    %c0_i32_1 = arith.constant 0 : i32
    return %c0_i32, %c0_i32_0 : i32, i32
  }
  func.func @transform_10(%arg0: i32, %arg1: memref<4xi32, #tpu.memory_space<smem>>) -> (i32, i32, i32) {
    %c0_i32 = arith.constant 0 : i32
    %c0_i32_0 = arith.constant 0 : i32
    %c0_i32_1 = arith.constant 0 : i32
    return %arg0, %c0_i32, %c0_i32_0 : i32, i32, i32
  }
  func.func @transform_11(%arg0: i32, %arg1: memref<4xi32, #tpu.memory_space<smem>>) -> (i32, i32) {
    %c0_i32 = arith.constant 0 : i32
    %c0_i32_0 = arith.constant 0 : i32
    %c0_i32_1 = arith.constant 0 : i32
    return %c0_i32, %c0_i32_0 : i32, i32
  }
}

</mosaic_0001>

<llo_original>
// kernel: estonian_decoder_forward.1
$region0: #{estonian_decoder_forward.1}
  #allocation0 [shape = 'u32[]', space=smem, size = 0x4, offset = 0x4, fixed_abs, tag = 'smem constant byte address 0x4 - core index']
  #allocation1 [shape = 'u32[144,128]{1,0:T(1,128)}', space=vmem, size = 0x12000, scoped, tag = 'internal scratch']
  #allocation2 [shape = 'f32[2,128]{1,0:T(2,128)}', space=vmem, size = 0x400, scoped, tag = 'scratch operand']
  #allocation3 [shape = 's32[1]{0}', space=sflag, size = 0x4, scoped, tag = 'scoped memory for estonian_decoder_forward.1']
  #allocation4 [shape = 'u8[512]{0}', space=smem, size = 0x200, scoped, tag = 'prefetched SMEM operand 0']
  %s0 = inlined_call_operand.vmem [shape: s32[4], index: 0, kind: input, shape index: {}]
  %s1 = inlined_call_operand.hbm [shape: f32[50,128], index: 1, kind: input, shape index: {}]
  %s2 = inlined_call_operand.hbm [shape: f32[32,128], index: 2, kind: input, shape index: {}]
  %s3 = inlined_call_operand.vmem [shape: f32[32,128], index: 3, kind: input, shape index: {}]
  %s4 = inlined_call_operand.hbm [shape: f32[32,128], index: 4, kind: input, shape index: {}]
  %s5 = inlined_call_operand.vmem [shape: f32[1,128], index: 5, kind: input, shape index: {}]
  %s6 = inlined_call_operand.hbm [shape: f32[32,32], index: 6, kind: input, shape index: {}]
  %s7 = inlined_call_operand.vmem [shape: f32[1,32], index: 7, kind: input, shape index: {}]
  %s8 = inlined_call_operand.hbm [shape: f32[32,128], index: 8, kind: input, shape index: {}]
  %s9 = inlined_call_operand.vmem [shape: f32[1,128], index: 9, kind: input, shape index: {}]
  %s10 = inlined_call_operand.vmem [shape: f32[2,128], index: 10, kind: input, shape index: {}, may-alias: {10,12}]
  %s11 = inlined_call_operand.vmem [shape: f32[1,2,128], index: 11, kind: output, shape index: {0}]
  %s12 = inlined_call_operand.vmem [shape: f32[2,128], index: 12, kind: output, shape index: {1}, may-alias: {10,12}]
  %13 = xla_tuple %s11, %s12
  %s14 = sld [smem:[#allocation0]]
  $region86: #{estonian_decoder_forward.1} parent=0
    _
  %s16 = ssub.s32 1, %s14
  %s17 = scalar_select 0, %s16, %s14
  %s18 = sshll.u32 %s0, 4
  %s19 = int_to_ptr.vmem [resolvable:$true] %s18
  %21 = dma.vmem_to_smem %s19, 16, [#allocation4], [#allocation3]
  %22 = dma.done [#allocation3], 16
  %23 = sfence
  $region1: #{estonian_decoder_forward.1} parent=0
    #allocation5 [shape = 'u8[28672]{0}', space=vmem, size = 0x7000, scoped, tag = 'input window, operand 1, single buffered']
    #allocation6 [shape = 's32[1]{0}', space=sflag, size = 0x4, scoped, tag = 'scoped memory for estonian_decoder_forward.1']
    #allocation7 [shape = 'u8[16384]{0}', space=vmem, size = 0x4000, scoped, tag = 'input window, operand 2, single buffered']
    #allocation8 [shape = 's32[1]{0}', space=sflag, size = 0x4, scoped, tag = 'scoped memory for estonian_decoder_forward.1']
    #allocation9 [shape = 'u8[16384]{0}', space=vmem, size = 0x4000, scoped, tag = 'input window, operand 4, single buffered']
    #allocation10 [shape = 'u8[16384]{0}', space=vmem, size = 0x4000, scoped, tag = 'input window, operand 6, single buffered']
    #allocation11 [shape = 's32[1]{0}', space=sflag, size = 0x4, scoped, tag = 'scoped memory for estonian_decoder_forward.1']
    #allocation12 [shape = 'u8[16384]{0}', space=vmem, size = 0x4000, scoped, tag = 'input window, operand 8, single buffered']
    %24 = vsyncpa [#allocation6], 0
    %25 = vsyncpa [#allocation8], 0
    %26 = vsyncpa [#allocation11], 0
    // Predicated region
    $region2: #{estonian_decoder_forward.1} parent=1 // pred_check
      _
    $region3: #{estonian_decoder_forward.1} parent=1 // pred_check_branch
      %28 = sbr.rel (0) target = $region5
    $region4: #{estonian_decoder_forward.1} parent=1 // pred_region
      %s30 = ssub.s32 896, 896
      %31 = vsyncadd [#allocation6], %s30
      %s32 = sshll.u32 [#allocation5], 4
      %s33 = int_to_ptr.vmem [resolvable:$true] %s32
      %38 = dma.hbm_to_vmem [thread:$0]  %s1, 896, %s33, [#allocation6], 128, 128, 8
    $region5: #{estonian_decoder_forward.1} parent=1 // pred_fallthru
      _
    // Predicated region
    $region6: #{estonian_decoder_forward.1} parent=1 // pred_check
      _
    $region7: #{estonian_decoder_forward.1} parent=1 // pred_check_branch
      %40 = sbr.rel (0) target = $region9
    $region8: #{estonian_decoder_forward.1} parent=1 // pred_region
      %s42 = ssub.s32 512, 512
      %43 = vsyncadd [#allocation8], %s42
      %s44 = sshll.u32 [#allocation7], 4
      %s45 = int_to_ptr.vmem [resolvable:$true] %s44
      %50 = dma.hbm_to_vmem [thread:$0]  %s2, 512, %s45, [#allocation8], 128, 128, 8
    $region9: #{estonian_decoder_forward.1} parent=1 // pred_fallthru
      _
    // Predicated region
    $region10: #{estonian_decoder_forward.1} parent=1 // pred_check
      _
    $region11: #{estonian_decoder_forward.1} parent=1 // pred_check_branch
      %52 = sbr.rel (0) target = $region13
    $region12: #{estonian_decoder_forward.1} parent=1 // pred_region
      _
    $region13: #{estonian_decoder_forward.1} parent=1 // pred_fallthru
      _
    // Predicated region
    $region14: #{estonian_decoder_forward.1} parent=1 // pred_check
      _
    $region15: #{estonian_decoder_forward.1} parent=1 // pred_check_branch
      %54 = sbr.rel (0) target = $region17
    $region16: #{estonian_decoder_forward.1} parent=1 // pred_region
      %s56 = ssub.s32 512, 512
      %57 = vsyncadd [#allocation8], %s56
      %s58 = sshll.u32 [#allocation9], 4
      %s59 = int_to_ptr.vmem [resolvable:$true] %s58
      %64 = dma.hbm_to_vmem [thread:$0]  %s4, 512, %s59, [#allocation8], 128, 128, 8
    $region17: #{estonian_decoder_forward.1} parent=1 // pred_fallthru
      _
    // Predicated region
    $region18: #{estonian_decoder_forward.1} parent=1 // pred_check
      _
    $region19: #{estonian_decoder_forward.1} parent=1 // pred_check_branch
      %66 = sbr.rel (0) target = $region21
    $region20: #{estonian_decoder_forward.1} parent=1 // pred_region
      _
    $region21: #{estonian_decoder_forward.1} parent=1 // pred_fallthru
      _
    // Predicated region
    $region22: #{estonian_decoder_forward.1} parent=1 // pred_check
      _
    $region23: #{estonian_decoder_forward.1} parent=1 // pred_check_branch
      %68 = sbr.rel (0) target = $region25
    $region24: #{estonian_decoder_forward.1} parent=1 // pred_region
      %s70 = ssub.s32 512, 512
      %71 = vsyncadd [#allocation11], %s70
      %s72 = sshll.u32 [#allocation10], 4
      %s73 = int_to_ptr.vmem [resolvable:$true] %s72
      %78 = dma.hbm_to_vmem [thread:$0]  %s6, 512, %s73, [#allocation11], 128, 128, 8
    $region25: #{estonian_decoder_forward.1} parent=1 // pred_fallthru
      _
    // Predicated region
    $region26: #{estonian_decoder_forward.1} parent=1 // pred_check
      _
    $region27: #{estonian_decoder_forward.1} parent=1 // pred_check_branch
      %80 = sbr.rel (0) target = $region29
    $region28: #{estonian_decoder_forward.1} parent=1 // pred_region
      _
    $region29: #{estonian_decoder_forward.1} parent=1 // pred_fallthru
      _
    // Predicated region
    $region30: #{estonian_decoder_forward.1} parent=1 // pred_check
      _
    $region31: #{estonian_decoder_forward.1} parent=1 // pred_check_branch
      %82 = sbr.rel (0) target = $region33
    $region32: #{estonian_decoder_forward.1} parent=1 // pred_region
      %s84 = ssub.s32 512, 512
      %85 = vsyncadd [#allocation11], %s84
      %s86 = sshll.u32 [#allocation12], 4
      %s87 = int_to_ptr.vmem [resolvable:$true] %s86
      %92 = dma.hbm_to_vmem [thread:$0]  %s8, 512, %s87, [#allocation11], 128, 128, 8
    $region33: #{estonian_decoder_forward.1} parent=1 // pred_fallthru
      _
    // Predicated region
    $region34: #{estonian_decoder_forward.1} parent=1 // pred_check
      _
    $region35: #{estonian_decoder_forward.1} parent=1 // pred_check_branch
      %94 = sbr.rel (0) target = $region37
    $region36: #{estonian_decoder_forward.1} parent=1 // pred_region
      _
    $region37: #{estonian_decoder_forward.1} parent=1 // pred_fallthru
      _
    // Predicated region
    $region38: #{estonian_decoder_forward.1} parent=1 // pred_check
      _
    $region39: #{estonian_decoder_forward.1} parent=1 // pred_check_branch
      %96 = sbr.rel (0) target = $region41
    $region40: #{estonian_decoder_forward.1} parent=1 // pred_region
      _
    $region41: #{estonian_decoder_forward.1} parent=1 // pred_fallthru
      _
    // Predicated region
    $region42: #{estonian_decoder_forward.1} parent=1 // pred_check
      _
    $region43: #{estonian_decoder_forward.1} parent=1 // pred_check_branch
      %98 = sbr.rel (0) target = $region45
    $region44: #{estonian_decoder_forward.1} parent=1 // pred_region
      %99 = dma.done [#allocation6], 896
    $region45: #{estonian_decoder_forward.1} parent=1 // pred_fallthru
      _
    // Predicated region
    $region46: #{estonian_decoder_forward.1} parent=1 // pred_check
      _
    $region47: #{estonian_decoder_forward.1} parent=1 // pred_check_branch
      %101 = sbr.rel (0) target = $region49
    $region48: #{estonian_decoder_forward.1} parent=1 // pred_region
      %102 = dma.done [#allocation8], 512
    $region49: #{estonian_decoder_forward.1} parent=1 // pred_fallthru
      _
    // Predicated region
    $region50: #{estonian_decoder_forward.1} parent=1 // pred_check
      _
    $region51: #{estonian_decoder_forward.1} parent=1 // pred_check_branch
      %104 = sbr.rel (0) target = $region53
    $region52: #{estonian_decoder_forward.1} parent=1 // pred_region
      %105 = dma.done [#allocation8], 512
    $region53: #{estonian_decoder_forward.1} parent=1 // pred_fallthru
      _
    // Predicated region
    $region54: #{estonian_decoder_forward.1} parent=1 // pred_check
      _
    $region55: #{estonian_decoder_forward.1} parent=1 // pred_check_branch
      %107 = sbr.rel (0) target = $region57
    $region56: #{estonian_decoder_forward.1} parent=1 // pred_region
      %108 = dma.done [#allocation11], 512
    $region57: #{estonian_decoder_forward.1} parent=1 // pred_fallthru
      _
    // Predicated region
    $region58: #{estonian_decoder_forward.1} parent=1 // pred_check
      _
    $region59: #{estonian_decoder_forward.1} parent=1 // pred_check_branch
      %110 = sbr.rel (0) target = $region61
    $region60: #{estonian_decoder_forward.1} parent=1 // pred_region
      %111 = dma.done [#allocation11], 512
    $region61: #{estonian_decoder_forward.1} parent=1 // pred_fallthru
      _
    %p112 = scmp.eq.s32.totalorder 0, 0
    // Predicated region
    $region62: #{estonian_decoder_forward.1} parent=1 // pred_check
      %p113 = pneg %p112
    $region63: #{estonian_decoder_forward.1} parent=1 // pred_check_branch
      %115 = sbr.rel (%p113) target = $region65
    $region64: #{estonian_decoder_forward.1} parent=1 // pred_region
      %v116 = vld [vmem:[%s10] sm:$0x3]
      %117 = vst [vmem:[#allocation2] sm:$0x3] %v116
    $region65: #{estonian_decoder_forward.1} parent=1 // pred_fallthru
      _
    %v118 = vld [vmem:[#allocation2] sm:$0x3]
    %s119 = smul.u32 0, 4
    %s120 = sld [smem:[#allocation4 + %s119]]
    %p121 = scmp.gt.s32.totalorder %s120, 0
    %s122 = scalar_select %p121, %s120, 0
    %p123 = scmp.lt.s32.totalorder %s122, 49
    %s124 = scalar_select %p123, %s122, 49
    %s125 = scalar_lea.vmem [#allocation5], %s124
    %v126 = vld [vmem:[%s125] sm:$0x1]
    %s127 = smul.u32 0, 2
    %s128 = sadd.s32 %s127, 1
    %s129 = smul.u32 %s128, 2
    %s130 = sld [smem:[#allocation4 + %s129]]
    %p131 = scmp.gt.s32.totalorder %s130, 0
    %s132 = scalar_select %p131, %s130, 0
    %p133 = scmp.lt.s32.totalorder %s132, 49
    %s134 = scalar_select %p133, %s132, 49
    %s135 = scalar_lea.vmem [#allocation5], %s134
    %v136 = vld [vmem:[%s135] sm:$0x1]
    %v138 = vrot.slane %v136, 7
    %vm140 = vcmask 1040384
    %v141 = vsel %vm140, %v126, %v138
    %v142 = vld [vmem:[#allocation7] sm:$0xff]
    %v143 = vld [vmem:[#allocation7 + $0x8] sm:$0xff]
    %v144 = vld [vmem:[#allocation7 + $0x10] sm:$0xff]
    %v145 = vld [vmem:[#allocation7 + $0x18] sm:$0xff]
    %vm146 = vcmask 261120
    %v148 = vsel %vm146, %v118, 0
    %150 = vmatprep.subr.mxu0 0.0
    %151 = vmatpush1.msra.mxu0 %v142
    %152 = vmatprep.subr.mxu0 0.0
    %153 = vmatpush1.msra.mxu0 %v143
    %154 = vmatprep.subr.mxu0 0.0
    %155 = vmatpush1.msra.mxu0 %v144
    %156 = vmatprep.subr.mxu0 0.0
    %157 = vmatpush1.msra.mxu0 %v145
    %158 = vmatprep.subr.mxu0 0.0
    %159 = vmatpush1.msra.mxu0 0.0
    %160 = vmatprep.subr.mxu0 0.0
    %161 = vmatpush1.msra.mxu0 0.0
    %162 = vmatprep.subr.mxu0 0.0
    %163 = vmatpush1.msra.mxu0 0.0
    %164 = vmatprep.subr.mxu0 0.0
    %165 = vmatpush1.msra.mxu0 0.0
    %166 = vmatprep.subr.mxu0 0.0
    %167 = vmatpush1.msra.mxu0 0.0
    %168 = vmatprep.subr.mxu0 0.0
    %169 = vmatpush1.msra.mxu0 0.0
    %170 = vmatprep.subr.mxu0 0.0
    %171 = vmatpush1.msra.mxu0 0.0
    %172 = vmatprep.subr.mxu0 0.0
    %173 = vmatpush1.msra.mxu0 0.0
    %174 = vmatprep.subr.mxu0 0.0
    %175 = vmatpush1.msra.mxu0 0.0
    %176 = vmatprep.subr.mxu0 0.0
    %177 = vmatpush1.msra.mxu0 0.0
    %178 = vmatprep.subr.mxu0 0.0
    %179 = vmatpush1.msra.mxu0 0.0
    %180 = vmatprep.subr.mxu0 0.0
    %181 = vmatpush1.msra.mxu0 0.0
    %182 = vmatprep.subr.mxu0 0.0
    %183 = vmatpush1.msra.mxu0 0.0
    %184 = vmatprep.subr.mxu0 0.0
    %185 = vmatpush1.msra.mxu0 0.0
    %186 = vmatprep.subr.mxu0 0.0
    %187 = vmatpush1.msra.mxu0 0.0
    %188 = vmatprep.subr.mxu0 0.0
    %189 = vmatpush1.msra.mxu0 0.0
    %190 = vmatprep.subr.mxu0 0.0
    %191 = vmatpush1.msra.mxu0 0.0
    %192 = vmatprep.subr.mxu0 0.0
    %193 = vmatpush1.msra.mxu0 0.0
    %194 = vmatprep.subr.mxu0 0.0
    %195 = vmatpush1.msra.mxu0 0.0
    %196 = vmatprep.subr.mxu0 0.0
    %197 = vmatpush1.msra.mxu0 0.0
    %198 = vmatprep.subr.mxu0 0.0
    %199 = vmatpush1.msra.mxu0 0.0
    %200 = vmatprep.subr.mxu0 0.0
    %201 = vmatpush1.msra.mxu0 0.0
    %202 = vmatprep.subr.mxu0 0.0
    %203 = vmatpush1.msra.mxu0 0.0
    %204 = vmatprep.subr.mxu0 0.0
    %205 = vmatpush1.msra.mxu0 0.0
    %206 = vmatprep.subr.mxu0 0.0
    %207 = vmatpush1.msra.mxu0 0.0
    %208 = vmatprep.subr.mxu0 0.0
    %209 = vmatpush1.msra.mxu0 0.0
    %210 = vmatprep.subr.mxu0 0.0
    %211 = vmatpush1.msra.mxu0 0.0
    %212 = vmatprep.subr.mxu0 0.0
    %213 = vmatpush1.msra.mxu0 0.0
    %214 = vmatprep.mubr.f32.mxu0 0.0
    %215 = vmatmul.mubr.f32.gmra.mrb[0].mxu0 %v148
    %v216 = vpop.f32.mrb[0].mxu0
    %v217 = vadd.f32 0.0, %v216
    %v218 = vpop.f32.mrb[0].mxu0
    %219 = vdwg.mxu0
    %v220 = vadd.f32 %v141, %v217
    %v221 = vxor.u32 %v220, 2147483648
    %v222 = vmul.f32 %v221, 1.442695
    %v223 = vpow.pop %v222
    %v224 = vadd.f32 %v223, 1.0
    %v225 = vrcp.pop %v224
    %v226 = vmul.f32 1.0, %v225
    %v227 = vtanh.pop %v220
    %v228 = vmul.f32 %v226, %v118
    %230 = vrot.lane.b32.xlu0 %v227, 64
    %v231 = vpop.permute.xlu0 %230
    %v233 = vmul.f32 %v226, %v231
    %235 = vrot.lane.b32.xlu0 %v233, 32
    %v236 = vpop.permute.xlu0 %235
    %v238 = vadd.f32 %v228, %v236
    %v239 = vtanh.pop %v238
    %241 = vrot.lane.b32.xlu0 %v239, 64
    %v242 = vpop.permute.xlu0 %241
    %v244 = vmul.f32 %v226, %v242
    %v245 = vld [vmem:[%s3] sm:$0xff]
    %v246 = vld [vmem:[%s3 + $0x8] sm:$0xff]
    %v247 = vld [vmem:[%s3 + $0x10] sm:$0xff]
    %v248 = vld [vmem:[%s3 + $0x18] sm:$0xff]
    %v249 = vld [vmem:[#allocation9] sm:$0xff]
    %v250 = vld [vmem:[#allocation9 + $0x8] sm:$0xff]
    %v251 = vld [vmem:[#allocation9 + $0x10] sm:$0xff]
    %v252 = vld [vmem:[#allocation9 + $0x18] sm:$0xff]
    %253 = vrot.lane.b32.xlu0 %v118, 64
    %v254 = vpop.permute.xlu0 %253
    %v255 = vsel %vm146, %v254, 0
    %257 = vmatprep.subr.mxu0 0.0
    %258 = vmatpush1.msra.mxu0 %v249
    %259 = vmatprep.subr.mxu0 0.0
    %260 = vmatpush1.msra.mxu0 %v250
    %261 = vmatprep.subr.mxu0 0.0
    %262 = vmatpush1.msra.mxu0 %v251
    %263 = vmatprep.subr.mxu0 0.0
    %264 = vmatpush1.msra.mxu0 %v252
    %265 = vmatprep.subr.mxu0 0.0
    %266 = vmatpush1.msra.mxu0 0.0
    %267 = vmatprep.subr.mxu0 0.0
    %268 = vmatpush1.msra.mxu0 0.0
    %269 = vmatprep.subr.mxu0 0.0
    %270 = vmatpush1.msra.mxu0 0.0
    %271 = vmatprep.subr.mxu0 0.0
    %272 = vmatpush1.msra.mxu0 0.0
    %273 = vmatprep.subr.mxu0 0.0
    %274 = vmatpush1.msra.mxu0 0.0
    %275 = vmatprep.subr.mxu0 0.0
    %276 = vmatpush1.msra.mxu0 0.0
    %277 = vmatprep.subr.mxu0 0.0
    %278 = vmatpush1.msra.mxu0 0.0
    %279 = vmatprep.subr.mxu0 0.0
    %280 = vmatpush1.msra.mxu0 0.0
    %281 = vmatprep.subr.mxu0 0.0
    %282 = vmatpush1.msra.mxu0 0.0
    %283 = vmatprep.subr.mxu0 0.0
    %284 = vmatpush1.msra.mxu0 0.0
    %285 = vmatprep.subr.mxu0 0.0
    %286 = vmatpush1.msra.mxu0 0.0
    %287 = vmatprep.subr.mxu0 0.0
    %288 = vmatpush1.msra.mxu0 0.0
    %289 = vmatprep.subr.mxu0 0.0
    %290 = vmatpush1.msra.mxu0 0.0
    %291 = vmatprep.subr.mxu0 0.0
    %292 = vmatpush1.msra.mxu0 0.0
    %293 = vmatprep.subr.mxu0 0.0
    %294 = vmatpush1.msra.mxu0 0.0
    %295 = vmatprep.subr.mxu0 0.0
    %296 = vmatpush1.msra.mxu0 0.0
    %297 = vmatprep.subr.mxu0 0.0
    %298 = vmatpush1.msra.mxu0 0.0
    %299 = vmatprep.subr.mxu0 0.0
    %300 = vmatpush1.msra.mxu0 0.0
    %301 = vmatprep.subr.mxu0 0.0
    %302 = vmatpush1.msra.mxu0 0.0
    %303 = vmatprep.subr.mxu0 0.0
    %304 = vmatpush1.msra.mxu0 0.0
    %305 = vmatprep.subr.mxu0 0.0
    %306 = vmatpush1.msra.mxu0 0.0
    %307 = vmatprep.subr.mxu0 0.0
    %308 = vmatpush1.msra.mxu0 0.0
    %309 = vmatprep.subr.mxu0 0.0
    %310 = vmatpush1.msra.mxu0 0.0
    %311 = vmatprep.subr.mxu0 0.0
    %312 = vmatpush1.msra.mxu0 0.0
    %313 = vmatprep.subr.mxu0 0.0
    %314 = vmatpush1.msra.mxu0 0.0
    %315 = vmatprep.subr.mxu0 0.0
    %316 = vmatpush1.msra.mxu0 0.0
    %317 = vmatprep.subr.mxu0 0.0
    %318 = vmatpush1.msra.mxu0 0.0
    %319 = vmatprep.subr.mxu0 0.0
    %320 = vmatpush1.msra.mxu0 0.0
    %321 = vmatprep.mubr.f32.mxu0 0.0
    %322 = vmatmul.mubr.f32.gmra.mrb[0].mxu0 %v255
    %v323 = vpop.f32.mrb[0].mxu0
    %v324 = vadd.f32 0.0, %v323
    %v325 = vpop.f32.mrb[0].mxu0
    %326 = vdwg.mxu0
    %328 = vrot.lane.b32.xlu0 %v244, 32
    %v329 = vpop.permute.xlu0 %328
    %v330 = vsel %vm146, %v329, 0
    %332 = vmatprep.subr.mxu0 0.0
    %333 = vmatpush1.msra.mxu0 %v245
    %334 = vmatprep.subr.mxu0 0.0
    %335 = vmatpush1.msra.mxu0 %v246
    %336 = vmatprep.subr.mxu0 0.0
    %337 = vmatpush1.msra.mxu0 %v247
    %338 = vmatprep.subr.mxu0 0.0
    %339 = vmatpush1.msra.mxu0 %v248
    %340 = vmatprep.subr.mxu0 0.0
    %341 = vmatpush1.msra.mxu0 0.0
    %342 = vmatprep.subr.mxu0 0.0
    %343 = vmatpush1.msra.mxu0 0.0
    %344 = vmatprep.subr.mxu0 0.0
    %345 = vmatpush1.msra.mxu0 0.0
    %346 = vmatprep.subr.mxu0 0.0
    %347 = vmatpush1.msra.mxu0 0.0
    %348 = vmatprep.subr.mxu0 0.0
    %349 = vmatpush1.msra.mxu0 0.0
    %350 = vmatprep.subr.mxu0 0.0
    %351 = vmatpush1.msra.mxu0 0.0
    %352 = vmatprep.subr.mxu0 0.0
    %353 = vmatpush1.msra.mxu0 0.0
    %354 = vmatprep.subr.mxu0 0.0
    %355 = vmatpush1.msra.mxu0 0.0
    %356 = vmatprep.subr.mxu0 0.0
    %357 = vmatpush1.msra.mxu0 0.0
    %358 = vmatprep.subr.mxu0 0.0
    %359 = vmatpush1.msra.mxu0 0.0
    %360 = vmatprep.subr.mxu0 0.0
    %361 = vmatpush1.msra.mxu0 0.0
    %362 = vmatprep.subr.mxu0 0.0
    %363 = vmatpush1.msra.mxu0 0.0
    %364 = vmatprep.subr.mxu0 0.0
    %365 = vmatpush1.msra.mxu0 0.0
    %366 = vmatprep.subr.mxu0 0.0
    %367 = vmatpush1.msra.mxu0 0.0
    %368 = vmatprep.subr.mxu0 0.0
    %369 = vmatpush1.msra.mxu0 0.0
    %370 = vmatprep.subr.mxu0 0.0
    %371 = vmatpush1.msra.mxu0 0.0
    %372 = vmatprep.subr.mxu0 0.0
    %373 = vmatpush1.msra.mxu0 0.0
    %374 = vmatprep.subr.mxu0 0.0
    %375 = vmatpush1.msra.mxu0 0.0
    %376 = vmatprep.subr.mxu0 0.0
    %377 = vmatpush1.msra.mxu0 0.0
    %378 = vmatprep.subr.mxu0 0.0
    %379 = vmatpush1.msra.mxu0 0.0
    %380 = vmatprep.subr.mxu0 0.0
    %381 = vmatpush1.msra.mxu0 0.0
    %382 = vmatprep.subr.mxu0 0.0
    %383 = vmatpush1.msra.mxu0 0.0
    %384 = vmatprep.subr.mxu0 0.0
    %385 = vmatpush1.msra.mxu0 0.0
    %386 = vmatprep.subr.mxu0 0.0
    %387 = vmatpush1.msra.mxu0 0.0
    %388 = vmatprep.subr.mxu0 0.0
    %389 = vmatpush1.msra.mxu0 0.0
    %390 = vmatprep.subr.mxu0 0.0
    %391 = vmatpush1.msra.mxu0 0.0
    %392 = vmatprep.subr.mxu0 0.0
    %393 = vmatpush1.msra.mxu0 0.0
    %394 = vmatprep.subr.mxu0 0.0
    %395 = vmatpush1.msra.mxu0 0.0
    %396 = vmatprep.mubr.f32.mxu0 0.0
    %397 = vmatmul.mubr.f32.gmra.mrb[0].mxu0 %v330
    %v398 = vpop.f32.mrb[0].mxu0
    %v399 = vadd.f32 %v324, %v398
    %v400 = vpop.f32.mrb[0].mxu0
    %401 = vdwg.mxu0
    %v402 = vld [vmem:[%s5] sm:$0x1]
    %v404 = vlaneseq
    %v405 = vshrl.u32 %v404, 7
    %v406 = vsub.s32 0, %v405
    %v407 = vrot.slane %v402, %v406
    %v409 = vadd.f32 %v399, %v407
    %v410 = vxor.u32 %v409, 2147483648
    %v411 = vmul.f32 %v410, 1.442695
    %v412 = vpow.pop %v411
    %v413 = vadd.f32 %v412, 1.0
    %v414 = vrcp.pop %v413
    %v415 = vmul.f32 1.0, %v414
    %v416 = vtanh.pop %v409
    %v418 = vmul.f32 %v415, %v254
    %420 = vrot.lane.b32.xlu0 %v416, 64
    %v421 = vpop.permute.xlu0 %420
    %v423 = vmul.f32 %v415, %v421
    %425 = vrot.lane.b32.xlu0 %v423, 32
    %v426 = vpop.permute.xlu0 %425
    %v428 = vadd.f32 %v418, %v426
    %v429 = vtanh.pop %v428
    %431 = vrot.lane.b32.xlu0 %v429, 64
    %v432 = vpop.permute.xlu0 %431
    %v434 = vmul.f32 %v415, %v432
    %s435 = sadd.s32 %s119, 1
    %s436 = sld [smem:[#allocation4 + %s435]]
    %p437 = scmp.gt.s32.totalorder %s436, 0
    %s438 = scalar_select %p437, %s436, 0
    %p439 = scmp.lt.s32.totalorder %s438, 49
    %s440 = scalar_select %p439, %s438, 49
    %s441 = scalar_lea.vmem [#allocation5], %s440
    %v442 = vld [vmem:[%s441] sm:$0x1]
    %s443 = sadd.s32 %s129, 1
    %s444 = sld [smem:[#allocation4 + %s443]]
    %p445 = scmp.gt.s32.totalorder %s444, 0
    %s446 = scalar_select %p445, %s444, 0
    %p447 = scmp.lt.s32.totalorder %s446, 49
    %s448 = scalar_select %p447, %s446, 49
    %s449 = scalar_lea.vmem [#allocation5], %s448
    %v450 = vld [vmem:[%s449] sm:$0x1]
    %v452 = vrot.slane %v450, 7
    %v454 = vsel %vm140, %v442, %v452
    %455 = vmatprep.subr.mxu0 0.0
    %456 = vmatpush1.msra.mxu0 %v142
    %457 = vmatprep.subr.mxu0 0.0
    %458 = vmatpush1.msra.mxu0 %v143
    %459 = vmatprep.subr.mxu0 0.0
    %460 = vmatpush1.msra.mxu0 %v144
    %461 = vmatprep.subr.mxu0 0.0
    %462 = vmatpush1.msra.mxu0 %v145
    %463 = vmatprep.subr.mxu0 0.0
    %464 = vmatpush1.msra.mxu0 0.0
    %465 = vmatprep.subr.mxu0 0.0
    %466 = vmatpush1.msra.mxu0 0.0
    %467 = vmatprep.subr.mxu0 0.0
    %468 = vmatpush1.msra.mxu0 0.0
    %469 = vmatprep.subr.mxu0 0.0
    %470 = vmatpush1.msra.mxu0 0.0
    %471 = vmatprep.subr.mxu0 0.0
    %472 = vmatpush1.msra.mxu0 0.0
    %473 = vmatprep.subr.mxu0 0.0
    %474 = vmatpush1.msra.mxu0 0.0
    %475 = vmatprep.subr.mxu0 0.0
    %476 = vmatpush1.msra.mxu0 0.0
    %477 = vmatprep.subr.mxu0 0.0
    %478 = vmatpush1.msra.mxu0 0.0
    %479 = vmatprep.subr.mxu0 0.0
    %480 = vmatpush1.msra.mxu0 0.0
    %481 = vmatprep.subr.mxu0 0.0
    %482 = vmatpush1.msra.mxu0 0.0
    %483 = vmatprep.subr.mxu0 0.0
    %484 = vmatpush1.msra.mxu0 0.0
    %485 = vmatprep.subr.mxu0 0.0
    %486 = vmatpush1.msra.mxu0 0.0
    %487 = vmatprep.subr.mxu0 0.0
    %488 = vmatpush1.msra.mxu0 0.0
    %489 = vmatprep.subr.mxu0 0.0
    %490 = vmatpush1.msra.mxu0 0.0
    %491 = vmatprep.subr.mxu0 0.0
    %492 = vmatpush1.msra.mxu0 0.0
    %493 = vmatprep.subr.mxu0 0.0
    %494 = vmatpush1.msra.mxu0 0.0
    %495 = vmatprep.subr.mxu0 0.0
    %496 = vmatpush1.msra.mxu0 0.0
    %497 = vmatprep.subr.mxu0 0.0
    %498 = vmatpush1.msra.mxu0 0.0
    %499 = vmatprep.subr.mxu0 0.0
    %500 = vmatpush1.msra.mxu0 0.0
    %501 = vmatprep.subr.mxu0 0.0
    %502 = vmatpush1.msra.mxu0 0.0
    %503 = vmatprep.subr.mxu0 0.0
    %504 = vmatpush1.msra.mxu0 0.0
    %505 = vmatprep.subr.mxu0 0.0
    %506 = vmatpush1.msra.mxu0 0.0
    %507 = vmatprep.subr.mxu0 0.0
    %508 = vmatpush1.msra.mxu0 0.0
    %509 = vmatprep.subr.mxu0 0.0
    %510 = vmatpush1.msra.mxu0 0.0
    %511 = vmatprep.subr.mxu0 0.0
    %512 = vmatpush1.msra.mxu0 0.0
    %513 = vmatprep.subr.mxu0 0.0
    %514 = vmatpush1.msra.mxu0 0.0
    %515 = vmatprep.subr.mxu0 0.0
    %516 = vmatpush1.msra.mxu0 0.0
    %517 = vmatprep.subr.mxu0 0.0
    %518 = vmatpush1.msra.mxu0 0.0
    %519 = vmatprep.mubr.f32.mxu0 0.0
    %520 = vmatmul.mubr.f32.gmra.mrb[0].mxu0 %v330
    %v521 = vpop.f32.mrb[0].mxu0
    %v522 = vadd.f32 0.0, %v521
    %v523 = vpop.f32.mrb[0].mxu0
    %524 = vdwg.mxu0
    %v525 = vadd.f32 %v454, %v522
    %v526 = vxor.u32 %v525, 2147483648
    %v527 = vmul.f32 %v526, 1.442695
    %v528 = vpow.pop %v527
    %v529 = vadd.f32 %v528, 1.0
    %v530 = vrcp.pop %v529
    %v531 = vmul.f32 1.0, %v530
    %v532 = vtanh.pop %v525
    %v533 = vmul.f32 %v531, %v238
    %535 = vrot.lane.b32.xlu0 %v532, 64
    %v536 = vpop.permute.xlu0 %535
    %v538 = vmul.f32 %v531, %v536
    %540 = vrot.lane.b32.xlu0 %v538, 32
    %v541 = vpop.permute.xlu0 %540
    %v543 = vadd.f32 %v533, %v541
    %v544 = vtanh.pop %v543
    %546 = vrot.lane.b32.xlu0 %v544, 64
    %v547 = vpop.permute.xlu0 %546
    %v549 = vmul.f32 %v531, %v547
    %551 = vrot.lane.b32.xlu0 %v434, 32
    %v552 = vpop.permute.xlu0 %551
    %v553 = vsel %vm146, %v552, 0
    %555 = vmatprep.subr.mxu0 0.0
    %556 = vmatpush1.msra.mxu0 %v249
    %557 = vmatprep.subr.mxu0 0.0
    %558 = vmatpush1.msra.mxu0 %v250
    %559 = vmatprep.subr.mxu0 0.0
    %560 = vmatpush1.msra.mxu0 %v251
    %561 = vmatprep.subr.mxu0 0.0
    %562 = vmatpush1.msra.mxu0 %v252
    %563 = vmatprep.subr.mxu0 0.0
    %564 = vmatpush1.msra.mxu0 0.0
    %565 = vmatprep.subr.mxu0 0.0
    %566 = vmatpush1.msra.mxu0 0.0
    %567 = vmatprep.subr.mxu0 0.0
    %568 = vmatpush1.msra.mxu0 0.0
    %569 = vmatprep.subr.mxu0 0.0
    %570 = vmatpush1.msra.mxu0 0.0
    %571 = vmatprep.subr.mxu0 0.0
    %572 = vmatpush1.msra.mxu0 0.0
    %573 = vmatprep.subr.mxu0 0.0
    %574 = vmatpush1.msra.mxu0 0.0
    %575 = vmatprep.subr.mxu0 0.0
    %576 = vmatpush1.msra.mxu0 0.0
    %577 = vmatprep.subr.mxu0 0.0
    %578 = vmatpush1.msra.mxu0 0.0
    %579 = vmatprep.subr.mxu0 0.0
    %580 = vmatpush1.msra.mxu0 0.0
    %581 = vmatprep.subr.mxu0 0.0
    %582 = vmatpush1.msra.mxu0 0.0
    %583 = vmatprep.subr.mxu0 0.0
    %584 = vmatpush1.msra.mxu0 0.0
    %585 = vmatprep.subr.mxu0 0.0
    %586 = vmatpush1.msra.mxu0 0.0
    %587 = vmatprep.subr.mxu0 0.0
    %588 = vmatpush1.msra.mxu0 0.0
    %589 = vmatprep.subr.mxu0 0.0
    %590 = vmatpush1.msra.mxu0 0.0
    %591 = vmatprep.subr.mxu0 0.0
    %592 = vmatpush1.msra.mxu0 0.0
    %593 = vmatprep.subr.mxu0 0.0
    %594 = vmatpush1.msra.mxu0 0.0
    %595 = vmatprep.subr.mxu0 0.0
    %596 = vmatpush1.msra.mxu0 0.0
    %597 = vmatprep.subr.mxu0 0.0
    %598 = vmatpush1.msra.mxu0 0.0
    %599 = vmatprep.subr.mxu0 0.0
    %600 = vmatpush1.msra.mxu0 0.0
    %601 = vmatprep.subr.mxu0 0.0
    %602 = vmatpush1.msra.mxu0 0.0
    %603 = vmatprep.subr.mxu0 0.0
    %604 = vmatpush1.msra.mxu0 0.0
    %605 = vmatprep.subr.mxu0 0.0
    %606 = vmatpush1.msra.mxu0 0.0
    %607 = vmatprep.subr.mxu0 0.0
    %608 = vmatpush1.msra.mxu0 0.0
    %609 = vmatprep.subr.mxu0 0.0
    %610 = vmatpush1.msra.mxu0 0.0
    %611 = vmatprep.subr.mxu0 0.0
    %612 = vmatpush1.msra.mxu0 0.0
    %613 = vmatprep.subr.mxu0 0.0
    %614 = vmatpush1.msra.mxu0 0.0
    %615 = vmatprep.subr.mxu0 0.0
    %616 = vmatpush1.msra.mxu0 0.0
    %617 = vmatprep.subr.mxu0 0.0
    %618 = vmatpush1.msra.mxu0 0.0
    %619 = vmatprep.mubr.f32.mxu0 0.0
    %620 = vmatmul.mubr.f32.gmra.mrb[0].mxu0 %v553
    %v621 = vpop.f32.mrb[0].mxu0
    %v622 = vadd.f32 0.0, %v621
    %v623 = vpop.f32.mrb[0].mxu0
    %624 = vdwg.mxu0
    %626 = vrot.lane.b32.xlu0 %v549, 32
    %v627 = vpop.permute.xlu0 %626
    %v628 = vsel %vm146, %v627, 0
    %630 = vmatprep.subr.mxu0 0.0
    %631 = vmatpush1.msra.mxu0 %v245
    %632 = vmatprep.subr.mxu0 0.0
    %633 = vmatpush1.msra.mxu0 %v246
    %634 = vmatprep.subr.mxu0 0.0
    %635 = vmatpush1.msra.mxu0 %v247
    %636 = vmatprep.subr.mxu0 0.0
    %637 = vmatpush1.msra.mxu0 %v248
    %638 = vmatprep.subr.mxu0 0.0
    %639 = vmatpush1.msra.mxu0 0.0
    %640 = vmatprep.subr.mxu0 0.0
    %641 = vmatpush1.msra.mxu0 0.0
    %642 = vmatprep.subr.mxu0 0.0
    %643 = vmatpush1.msra.mxu0 0.0
    %644 = vmatprep.subr.mxu0 0.0
    %645 = vmatpush1.msra.mxu0 0.0
    %646 = vmatprep.subr.mxu0 0.0
    %647 = vmatpush1.msra.mxu0 0.0
    %648 = vmatprep.subr.mxu0 0.0
    %649 = vmatpush1.msra.mxu0 0.0
    %650 = vmatprep.subr.mxu0 0.0
    %651 = vmatpush1.msra.mxu0 0.0
    %652 = vmatprep.subr.mxu0 0.0
    %653 = vmatpush1.msra.mxu0 0.0
    %654 = vmatprep.subr.mxu0 0.0
    %655 = vmatpush1.msra.mxu0 0.0
    %656 = vmatprep.subr.mxu0 0.0
    %657 = vmatpush1.msra.mxu0 0.0
    %658 = vmatprep.subr.mxu0 0.0
    %659 = vmatpush1.msra.mxu0 0.0
    %660 = vmatprep.subr.mxu0 0.0
    %661 = vmatpush1.msra.mxu0 0.0
    %662 = vmatprep.subr.mxu0 0.0
    %663 = vmatpush1.msra.mxu0 0.0
    %664 = vmatprep.subr.mxu0 0.0
    %665 = vmatpush1.msra.mxu0 0.0
    %666 = vmatprep.subr.mxu0 0.0
    %667 = vmatpush1.msra.mxu0 0.0
    %668 = vmatprep.subr.mxu0 0.0
    %669 = vmatpush1.msra.mxu0 0.0
    %670 = vmatprep.subr.mxu0 0.0
    %671 = vmatpush1.msra.mxu0 0.0
    %672 = vmatprep.subr.mxu0 0.0
    %673 = vmatpush1.msra.mxu0 0.0
    %674 = vmatprep.subr.mxu0 0.0
    %675 = vmatpush1.msra.mxu0 0.0
    %676 = vmatprep.subr.mxu0 0.0
    %677 = vmatpush1.msra.mxu0 0.0
    %678 = vmatprep.subr.mxu0 0.0
    %679 = vmatpush1.msra.mxu0 0.0
    %680 = vmatprep.subr.mxu0 0.0
    %681 = vmatpush1.msra.mxu0 0.0
    %682 = vmatprep.subr.mxu0 0.0
    %683 = vmatpush1.msra.mxu0 0.0
    %684 = vmatprep.subr.mxu0 0.0
    %685 = vmatpush1.msra.mxu0 0.0
    %686 = vmatprep.subr.mxu0 0.0
    %687 = vmatpush1.msra.mxu0 0.0
    %688 = vmatprep.subr.mxu0 0.0
    %689 = vmatpush1.msra.mxu0 0.0
    %690 = vmatprep.subr.mxu0 0.0
    %691 = vmatpush1.msra.mxu0 0.0
    %692 = vmatprep.subr.mxu0 0.0
    %693 = vmatpush1.msra.mxu0 0.0
    %694 = vmatprep.mubr.f32.mxu0 0.0
    %695 = vmatmul.mubr.f32.gmra.mrb[0].mxu0 %v628
    %v696 = vpop.f32.mrb[0].mxu0
    %v697 = vadd.f32 %v622, %v696
    %v698 = vpop.f32.mrb[0].mxu0
    %699 = vdwg.mxu0
    %v700 = vadd.f32 %v697, %v407
    %v701 = vxor.u32 %v700, 2147483648
    %v702 = vmul.f32 %v701, 1.442695
    %v703 = vpow.pop %v702
    %v704 = vadd.f32 %v703, 1.0
    %v705 = vrcp.pop %v704
    %v706 = vmul.f32 1.0, %v705
    %v707 = vtanh.pop %v700
    %v708 = vmul.f32 %v706, %v428
    %710 = vrot.lane.b32.xlu0 %v707, 64
    %v711 = vpop.permute.xlu0 %710
    %v713 = vmul.f32 %v706, %v711
    %715 = vrot.lane.b32.xlu0 %v713, 32
    %v716 = vpop.permute.xlu0 %715
    %v718 = vadd.f32 %v708, %v716
    %v719 = vtanh.pop %v718
    %721 = vrot.lane.b32.xlu0 %v719, 64
    %v722 = vpop.permute.xlu0 %721
    %v724 = vmul.f32 %v706, %v722
    %727 = vrot.lane.b32.xlu0 %v724, 96
    %v728 = vpop.permute.xlu0 %727
    %731 = vrot.lane.b32.xlu0 %v718, 64
    %v732 = vpop.permute.xlu0 %731
    %v734 = vsel %vm146, %v627, %v543
    %vm735 = vcmask 523264
    %v736 = vsel %vm735, %v734, %v728
    %vm737 = vcmask 785408
    %v738 = vsel %vm737, %v736, %v732
    %739 = vst [vmem:[#allocation2] sm:$0x3] %v738
    %v740 = vld [vmem:[#allocation10] sm:$0xff]
    %v741 = vld [vmem:[#allocation10 + $0x8] sm:$0xff]
    %v742 = vld [vmem:[#allocation10 + $0x10] sm:$0xff]
    %v743 = vld [vmem:[#allocation10 + $0x18] sm:$0xff]
    %v744 = vld [vmem:[%s7] sm:$0x1]
    %v746 = vlaneseq
    %v747 = vshrl.u32 %v746, 7
    %v748 = vsub.s32 0, %v747
    %v749 = vrot.slane %v744, %v748
    %751 = vrot.lane.b32.xlu0 %v724, 32
    %v752 = vpop.permute.xlu0 %751
    %v753 = vsel %vm146, %v752, 0
    %755 = vmatprep.subr.mxu0 0.0
    %756 = vmatpush1.msra.mxu0 %v740
    %757 = vmatprep.subr.mxu0 0.0
    %758 = vmatpush1.msra.mxu0 %v741
    %759 = vmatprep.subr.mxu0 0.0
    %760 = vmatpush1.msra.mxu0 %v742
    %761 = vmatprep.subr.mxu0 0.0
    %762 = vmatpush1.msra.mxu0 %v743
    %763 = vmatprep.subr.mxu0 0.0
    %764 = vmatpush1.msra.mxu0 0.0
    %765 = vmatprep.subr.mxu0 0.0
    %766 = vmatpush1.msra.mxu0 0.0
    %767 = vmatprep.subr.mxu0 0.0
    %768 = vmatpush1.msra.mxu0 0.0
    %769 = vmatprep.subr.mxu0 0.0
    %770 = vmatpush1.msra.mxu0 0.0
    %771 = vmatprep.subr.mxu0 0.0
    %772 = vmatpush1.msra.mxu0 0.0
    %773 = vmatprep.subr.mxu0 0.0
    %774 = vmatpush1.msra.mxu0 0.0
    %775 = vmatprep.subr.mxu0 0.0
    %776 = vmatpush1.msra.mxu0 0.0
    %777 = vmatprep.subr.mxu0 0.0
    %778 = vmatpush1.msra.mxu0 0.0
    %779 = vmatprep.subr.mxu0 0.0
    %780 = vmatpush1.msra.mxu0 0.0
    %781 = vmatprep.subr.mxu0 0.0
    %782 = vmatpush1.msra.mxu0 0.0
    %783 = vmatprep.subr.mxu0 0.0
    %784 = vmatpush1.msra.mxu0 0.0
    %785 = vmatprep.subr.mxu0 0.0
    %786 = vmatpush1.msra.mxu0 0.0
    %787 = vmatprep.subr.mxu0 0.0
    %788 = vmatpush1.msra.mxu0 0.0
    %789 = vmatprep.subr.mxu0 0.0
    %790 = vmatpush1.msra.mxu0 0.0
    %791 = vmatprep.subr.mxu0 0.0
    %792 = vmatpush1.msra.mxu0 0.0
    %793 = vmatprep.subr.mxu0 0.0
    %794 = vmatpush1.msra.mxu0 0.0
    %795 = vmatprep.subr.mxu0 0.0
    %796 = vmatpush1.msra.mxu0 0.0
    %797 = vmatprep.subr.mxu0 0.0
    %798 = vmatpush1.msra.mxu0 0.0
    %799 = vmatprep.subr.mxu0 0.0
    %800 = vmatpush1.msra.mxu0 0.0
    %801 = vmatprep.subr.mxu0 0.0
    %802 = vmatpush1.msra.mxu0 0.0
    %803 = vmatprep.subr.mxu0 0.0
    %804 = vmatpush1.msra.mxu0 0.0
    %805 = vmatprep.subr.mxu0 0.0
    %806 = vmatpush1.msra.mxu0 0.0
    %807 = vmatprep.subr.mxu0 0.0
    %808 = vmatpush1.msra.mxu0 0.0
    %809 = vmatprep.subr.mxu0 0.0
    %810 = vmatpush1.msra.mxu0 0.0
    %811 = vmatprep.subr.mxu0 0.0
    %812 = vmatpush1.msra.mxu0 0.0
    %813 = vmatprep.subr.mxu0 0.0
    %814 = vmatpush1.msra.mxu0 0.0
    %815 = vmatprep.subr.mxu0 0.0
    %816 = vmatpush1.msra.mxu0 0.0
    %817 = vmatprep.subr.mxu0 0.0
    %818 = vmatpush1.msra.mxu0 0.0
    %819 = vmatprep.mubr.f32.mxu0 0.0
    %820 = vmatmul.mubr.f32.gmra.mrb[0].mxu0 %v753
    %v821 = vpop.f32.mrb[0].mxu0
    %v822 = vadd.f32 %v749, %v821
    %v823 = vpop.f32.mrb[0].mxu0
    %824 = vdwg.mxu0
    %v825 = vmax.f32 %v822, 0.0
    %v826 = vld [vmem:[#allocation12] sm:$0xff]
    %v827 = vld [vmem:[#allocation12 + $0x8] sm:$0xff]
    %v828 = vld [vmem:[#allocation12 + $0x10] sm:$0xff]
    %v829 = vld [vmem:[#allocation12 + $0x18] sm:$0xff]
    %v830 = vld [vmem:[%s9] sm:$0x1]
    %v832 = vlaneseq
    %v833 = vshrl.u32 %v832, 7
    %v834 = vsub.s32 0, %v833
    %v835 = vrot.slane %v830, %v834
    %v838 = vsel %vm146, %v825, 0
    %840 = vmatprep.subr.mxu0 0.0
    %841 = vmatpush1.msra.mxu0 %v826
    %842 = vmatprep.subr.mxu0 0.0
    %843 = vmatpush1.msra.mxu0 %v827
    %844 = vmatprep.subr.mxu0 0.0
    %845 = vmatpush1.msra.mxu0 %v828
    %846 = vmatprep.subr.mxu0 0.0
    %847 = vmatpush1.msra.mxu0 %v829
    %848 = vmatprep.subr.mxu0 0.0
    %849 = vmatpush1.msra.mxu0 0.0
    %850 = vmatprep.subr.mxu0 0.0
    %851 = vmatpush1.msra.mxu0 0.0
    %852 = vmatprep.subr.mxu0 0.0
    %853 = vmatpush1.msra.mxu0 0.0
    %854 = vmatprep.subr.mxu0 0.0
    %855 = vmatpush1.msra.mxu0 0.0
    %856 = vmatprep.subr.mxu0 0.0
    %857 = vmatpush1.msra.mxu0 0.0
    %858 = vmatprep.subr.mxu0 0.0
    %859 = vmatpush1.msra.mxu0 0.0
    %860 = vmatprep.subr.mxu0 0.0
    %861 = vmatpush1.msra.mxu0 0.0
    %862 = vmatprep.subr.mxu0 0.0
    %863 = vmatpush1.msra.mxu0 0.0
    %864 = vmatprep.subr.mxu0 0.0
    %865 = vmatpush1.msra.mxu0 0.0
    %866 = vmatprep.subr.mxu0 0.0
    %867 = vmatpush1.msra.mxu0 0.0
    %868 = vmatprep.subr.mxu0 0.0
    %869 = vmatpush1.msra.mxu0 0.0
    %870 = vmatprep.subr.mxu0 0.0
    %871 = vmatpush1.msra.mxu0 0.0
    %872 = vmatprep.subr.mxu0 0.0
    %873 = vmatpush1.msra.mxu0 0.0
    %874 = vmatprep.subr.mxu0 0.0
    %875 = vmatpush1.msra.mxu0 0.0
    %876 = vmatprep.subr.mxu0 0.0
    %877 = vmatpush1.msra.mxu0 0.0
    %878 = vmatprep.subr.mxu0 0.0
    %879 = vmatpush1.msra.mxu0 0.0
    %880 = vmatprep.subr.mxu0 0.0
    %881 = vmatpush1.msra.mxu0 0.0
    %882 = vmatprep.subr.mxu0 0.0
    %883 = vmatpush1.msra.mxu0 0.0
    %884 = vmatprep.subr.mxu0 0.0
    %885 = vmatpush1.msra.mxu0 0.0
    %886 = vmatprep.subr.mxu0 0.0
    %887 = vmatpush1.msra.mxu0 0.0
    %888 = vmatprep.subr.mxu0 0.0
    %889 = vmatpush1.msra.mxu0 0.0
    %890 = vmatprep.subr.mxu0 0.0
    %891 = vmatpush1.msra.mxu0 0.0
    %892 = vmatprep.subr.mxu0 0.0
    %893 = vmatpush1.msra.mxu0 0.0
    %894 = vmatprep.subr.mxu0 0.0
    %895 = vmatpush1.msra.mxu0 0.0
    %896 = vmatprep.subr.mxu0 0.0
    %897 = vmatpush1.msra.mxu0 0.0
    %898 = vmatprep.subr.mxu0 0.0
    %899 = vmatpush1.msra.mxu0 0.0
    %900 = vmatprep.subr.mxu0 0.0
    %901 = vmatpush1.msra.mxu0 0.0
    %902 = vmatprep.subr.mxu0 0.0
    %903 = vmatpush1.msra.mxu0 0.0
    %904 = vmatprep.mubr.f32.mxu0 0.0
    %905 = vmatmul.mubr.f32.gmra.mrb[0].mxu0 %v838
    %v906 = vpop.f32.mrb[0].mxu0
    %v907 = vadd.f32 %v835, %v906
    %v908 = vpop.f32.mrb[0].mxu0
    %909 = vdwg.mxu0
    %910 = vst [vmem:[%s11] sm:$0x3] %v907
    // Predicated region
    $region66: #{estonian_decoder_forward.1} parent=1 // pred_check
      %p911 = pneg %p112
    $region67: #{estonian_decoder_forward.1} parent=1 // pred_check_branch
      %913 = sbr.rel (%p911) target = $region69
    $region68: #{estonian_decoder_forward.1} parent=1 // pred_region
      %v914 = vld [vmem:[#allocation2] sm:$0x3]
      %915 = vst [vmem:[%s12] sm:$0x3] %v914
    $region69: #{estonian_decoder_forward.1} parent=1 // pred_fallthru
      _
    // Predicated region
    $region70: #{estonian_decoder_forward.1} parent=1 // pred_check
      _
    $region71: #{estonian_decoder_forward.1} parent=1 // pred_check_branch
      %917 = sbr.rel (0) target = $region73
    $region72: #{estonian_decoder_forward.1} parent=1 // pred_region
      _
    $region73: #{estonian_decoder_forward.1} parent=1 // pred_fallthru
      _
    // Predicated region
    $region74: #{estonian_decoder_forward.1} parent=1 // pred_check
      _
    $region75: #{estonian_decoder_forward.1} parent=1 // pred_check_branch
      %919 = sbr.rel (0) target = $region77
    $region76: #{estonian_decoder_forward.1} parent=1 // pred_region
      _
    $region77: #{estonian_decoder_forward.1} parent=1 // pred_fallthru
      _
    // Predicated region
    $region78: #{estonian_decoder_forward.1} parent=1 // pred_check
      _
    $region79: #{estonian_decoder_forward.1} parent=1 // pred_check_branch
      %921 = sbr.rel (0) target = $region81
    $region80: #{estonian_decoder_forward.1} parent=1 // pred_region
      _
    $region81: #{estonian_decoder_forward.1} parent=1 // pred_fallthru
      _
    // Predicated region
    $region82: #{estonian_decoder_forward.1} parent=1 // pred_check
      _
    $region83: #{estonian_decoder_forward.1} parent=1 // pred_check_branch
      %923 = sbr.rel (0) target = $region85
    $region84: #{estonian_decoder_forward.1} parent=1 // pred_region
      _
    $region85: #{estonian_decoder_forward.1} parent=1 // pred_fallthru
      _
    %924 = vsyncpa [#allocation6], 1
    %925 = vsyncpa [#allocation8], 1
    %926 = vsyncpa [#allocation11], 1

</llo_original>
